<compile_context>
chip_gen: v6e
topology: v6e:2x2x1
jax: 0.10.0
libtpu: 0.0.40
codegen_flags: <defaults>
</compile_context>

<pallas_src>
import functools

import jax
import jax.numpy as jnp
from jax.experimental import pallas as pl
from jax.experimental.pallas import tpu as pltpu


def _gatv2_row_kernel(x_all_ref, x_row_ref, adj_ref,
                      w_src_ref, b_src_ref, w_dr_ref, b_dr_ref, a_rep_ref,
                      out_ref, *, hd, negative_slope, fuse_relu):
    """One destination-row tile of a dense GATv2Conv layer (DGL semantics).

    x_all_ref : (N, F)      features of every (source) node            [f32]
    x_row_ref : (TI, F)     features of this tile's destination rows   [f32]
    adj_ref   : (TI, N, 1)  adjacency rows (dst i, src j), 0/1         [f32]
    w_src_ref : (F, hd)     fc_src weight                              [bf16]
    b_src_ref : (1, hd)     fc_src bias                                [f32]
    w_dr_ref  : (F, 2*hd)   [fc_dst | res_fc] fused weight             [bf16]
    b_dr_ref  : (1, 2*hd)   [fc_dst | res_fc] fused bias               [f32]
    a_rep_ref : (hd, hd)    block attention matrix: head-h logit replicated
                            across that head's D lanes (lane dense)    [bf16]
    out_ref   : (TI, hd)                                               [f32]
    """
    n = x_all_ref.shape[0]
    ti = x_row_ref.shape[0]

    # Projections: bf16 MXU operands, f32 accumulation.  `el` (the per-source
    # message) is needed for every tile; er / res only for this tile's rows.
    # TODO(synk): hoist `el` to a separate pass when N / row_tile grows large.
    el = jnp.dot(x_all_ref[...].astype(jnp.bfloat16), w_src_ref[...],
                 preferred_element_type=jnp.float32) + b_src_ref[...]   # (N, hd)
    dr = jnp.dot(x_row_ref[...].astype(jnp.bfloat16), w_dr_ref[...],
                 preferred_element_type=jnp.float32) + b_dr_ref[...]    # (TI, 2*hd)
    er = dr[:, :hd]
    res = dr[:, hd:]

    # Edge features via broadcasts (no selector matmuls): s[i, j] = el[j] + er[i].
    s = el[None, :, :] + er[:, None, :]                                  # (TI, N, hd)
    s = jnp.where(s >= 0.0, s, negative_slope * s)                       # leaky_relu

    # GATv2 logits for all heads in one lane-dense MXU matmul; a_rep replicates
    # each head's logit across its D output lanes (no narrow (.., H) tensors).
    lg = jnp.dot(s.reshape(ti * n, hd).astype(jnp.bfloat16), a_rep_ref[...],
                 preferred_element_type=jnp.float32).reshape(ti, n, hd)

    # Masked edge softmax with a per-destination-row max (no underflow for
    # destinations whose incident-edge logits sit far below the global max).
    edge = adj_ref[...] > 0.0                                            # (TI, N, 1)
    m = jnp.max(jnp.where(edge, lg, -1e30), axis=1, keepdims=True)       # (TI, 1, hd)
    e = jnp.where(edge, jnp.exp(lg - m), 0.0)                            # (TI, N, hd)

    # Aggregation over the source axis: O(N^2*hd) VPU work + sublane reduce,
    # computed immediately so the big edge temporaries die early.
    num = jnp.sum(e * el[None, :, :], axis=1)                            # (TI, hd)
    den = jnp.sum(e, axis=1)                                             # (TI, hd)

    # Isolated destinations (den == 0) fall back to the residual branch (no NaN).
    out = num * pl.reciprocal(jnp.maximum(den, 1e-20), approx=False) + res
    if fuse_relu:                                                        # inter-layer F.relu
        out = jnp.maximum(out, 0.0)
    out_ref[...] = out.astype(out_ref.dtype)


def _gatv2_layer(x, adj3, w_src, b_src, w_dr, b_dr, a_rep, *, hd, row_tile,
                 negative_slope, fuse_relu):
    """Row-tiled GATv2Conv layer: grid over destination-row tiles (parallel)."""
    n, f_in = x.shape
    ti = min(row_tile, n)
    assert n % ti == 0 and ti % 8 == 0, "destination rows must tile by 8"
    steps = n // ti

    kernel = functools.partial(_gatv2_row_kernel, hd=hd,
                               negative_slope=negative_slope,
                               fuse_relu=fuse_relu)

    flops = (steps * 2 * n * f_in * hd          # el (recomputed per row tile)
             + 2 * n * f_in * 2 * hd            # er / res
             + 2 * n * n * hd * hd              # logit matmul on flat edges
             + 8 * n * n * hd)                  # edge elementwise + reductions
    cost = pl.CostEstimate(
        flops=flops,
        transcendentals=n * n * hd,
        bytes_accessed=(4 * (steps + 1) * n * f_in + 4 * n * n
                        + 2 * (3 * f_in * hd + hd * hd) + 4 * 3 * hd
                        + 4 * n * hd))

    return pl.pallas_call(
        kernel,
        out_shape=jax.ShapeDtypeStruct((n, hd), jnp.float32),
        grid=(steps,),
        in_specs=[
            pl.BlockSpec((n, f_in), lambda i: (0, 0)),       # x, all source nodes
            pl.BlockSpec((ti, f_in), lambda i: (i, 0)),      # x, this tile's dst rows
            pl.BlockSpec((ti, n, 1), lambda i: (i, 0, 0)),   # adjacency rows (dst tile)
            pl.BlockSpec((f_in, hd), lambda i: (0, 0)),      # w_src
            pl.BlockSpec((1, hd), lambda i: (0, 0)),         # b_src
            pl.BlockSpec((f_in, 2 * hd), lambda i: (0, 0)),  # [w_dst | w_res]
            pl.BlockSpec((1, 2 * hd), lambda i: (0, 0)),     # [b_dst | b_res]
            pl.BlockSpec((hd, hd), lambda i: (0, 0)),        # block attention matrix
        ],
        out_specs=pl.BlockSpec((ti, hd), lambda i: (i, 0)),
        compiler_params=pltpu.CompilerParams(
            dimension_semantics=("parallel",),
            vmem_limit_bytes=64 * 1024 * 1024),
        cost_estimate=cost,
    )(x, x, adj3, w_src, b_src, w_dr, b_dr, a_rep)


def _block_attn(attn):
    """(H, D) attention vector -> (H*D, H*D) block matrix whose matmul with the
    edge features yields each head's logit replicated across its D lanes."""
    h, d = attn.shape
    a4 = attn[:, :, None, None] * jnp.eye(h, dtype=attn.dtype)[:, None, :, None]
    a4 = jnp.broadcast_to(a4, (h, d, h, d))
    return a4.reshape(h * d, h * d)


def _pad_cols(w, width):
    return jnp.pad(w, ((0, 0), (0, width - w.shape[1])))


def unit_gat4_forward(adj, x, p1, p2, *, out_channels, negative_slope=0.2,
                      row_tile=8):
    """Mirrors unit_GAT4.forward: gat(8 heads) -> relu -> reshape -> gat2(1 head)."""
    n = x.shape[0]
    w_src1, b_src1, w_dst1, b_dst1, attn1, w_res1, b_res1 = p1
    w_src2, b_src2, w_dst2, b_dst2, attn2, w_res2, b_res2 = p2

    h1, d1 = attn1.shape
    hd1 = h1 * d1                               # 8 * out_channels (= 128 here)
    h2, d2 = attn2.shape
    # Layer-2 output lanes zero-padded to 128 so every layer-2 tensor and the
    # final store are lane dense.  Invariant (required for correctness): the
    # padded weight / bias / attention lanes are exactly zero and h2*d2 <= 128.
    assert h2 * d2 <= 128, "padded layer-2 formulation assumes <= 128 output lanes"
    hd2 = 128

    x = x.astype(jnp.float32)
    adj3 = adj.astype(jnp.float32).reshape(n, n, 1)

    # Layer-1 fused parameters (bf16 MXU weights / attention, f32 biases).
    ws1 = w_src1.astype(jnp.bfloat16)
    bs1 = b_src1.astype(jnp.float32)
    wdr1 = jnp.concatenate([w_dst1, w_res1], axis=1).astype(jnp.bfloat16)
    bdr1 = jnp.concatenate([b_dst1, b_res1], axis=1).astype(jnp.float32)
    a1 = _block_attn(attn1).astype(jnp.bfloat16)

    # Layer-2 fused parameters, zero-padded on the output axis (jnp.pad -> exact).
    ws2 = _pad_cols(w_src2, hd2).astype(jnp.bfloat16)
    bs2 = _pad_cols(b_src2, hd2).astype(jnp.float32)
    wdr2 = jnp.concatenate([_pad_cols(w_dst2, hd2), _pad_cols(w_res2, hd2)],
                           axis=1).astype(jnp.bfloat16)
    bdr2 = jnp.concatenate([_pad_cols(b_dst2, hd2), _pad_cols(b_res2, hd2)],
                           axis=1).astype(jnp.float32)
    a2 = _block_attn(_pad_cols(attn2, hd2)).astype(jnp.bfloat16)

    # gat (8 heads), inter-layer ReLU fused into its epilogue.
    y1 = _gatv2_layer(x, adj3, ws1, bs1, wdr1, bdr1, a1, hd=hd1,
                      row_tile=row_tile, negative_slope=negative_slope,
                      fuse_relu=True)
    # gat2 (1 head), padded to 128 lanes -> unmasked lane-dense final store.
    y2 = _gatv2_layer(y1, adj3, ws2, bs2, wdr2, bdr2, a2, hd=hd2,
                      row_tile=row_tile, negative_slope=negative_slope,
                      fuse_relu=False)

    # (N, num_heads=1, out_channels), matching the PyTorch module's output.
    return y2[:, :h2 * d2].reshape(n, h2, d2)


# ---------------------------------------------------------------------------
# Pure-JAX reference (f32 everywhere) for a correctness check.
# ---------------------------------------------------------------------------
def _gatv2_ref(x, adj, params, negative_slope=0.2):
    w_src, b_src, w_dst, b_dst, attn, w_res, b_res = params
    h, d = attn.shape
    el = (x @ w_src + b_src).reshape(-1, h, d)
    er = (x @ w_dst + b_dst).reshape(-1, h, d)
    res = (x @ w_res + b_res).reshape(-1, h, d)
    s = el[None, :, :, :] + er[:, None, :, :]          # (dst, src, h, d)
    s = jnp.where(s >= 0, s, negative_slope * s)
    logit = jnp.einsum('ijhd,hd->ijh', s, attn)
    mask = adj[:, :, None] > 0
    logit = jnp.where(mask, logit, -jnp.inf)
    alpha = jax.nn.softmax(logit, axis=1)
    alpha = jnp.where(mask, alpha, 0.0)
    out = jnp.einsum('ijh,jhd->ihd', alpha, el) + res
    return out.reshape(x.shape[0], h * d)


if __name__ == "__main__":
    N = 16              # number of graph nodes (x.shape[0] == bh)
    in_channels = 16
    out_channels = 16

    key = jax.random.PRNGKey(0)
    keys = iter(jax.random.split(key, 8))

    x = jax.random.normal(next(keys), (N, in_channels), jnp.float32)

    # deterministic adjacency with self-loops (every node has in-degree >= 1)
    adj_rand = (jax.random.uniform(next(keys), (N, N)) < 0.3).astype(jnp.float32)
    adj = jnp.maximum(adj_rand, jnp.eye(N, dtype=jnp.float32))

    def linear_params(k, fan_in, fan_out):
        kw, kb = jax.random.split(k)
        scale = (2.0 / (fan_in + fan_out)) ** 0.5
        w = scale * jax.random.normal(kw, (fan_in, fan_out), jnp.float32)
        b = 0.01 * jax.random.normal(kb, (1, fan_out), jnp.float32)
        return w, b

    def gat_params(k, in_feats, out_feats, num_heads):
        k1, k2, k3, k4 = jax.random.split(k, 4)
        w_src, b_src = linear_params(k1, in_feats, num_heads * out_feats)
        w_dst, b_dst = linear_params(k2, in_feats, num_heads * out_feats)
        attn = ((2.0 / (out_feats + 1)) ** 0.5 *
                jax.random.normal(k3, (num_heads, out_feats), jnp.float32))
        w_res, b_res = linear_params(k4, in_feats, num_heads * out_feats)
        return (w_src, b_src, w_dst, b_dst, attn, w_res, b_res)

    # gat : in_channels -> out_channels, 8 heads
    p1 = gat_params(next(keys), in_channels, out_channels, 8)
    # gat2: 8*out_channels -> out_channels, 1 head
    p2 = gat_params(next(keys), out_channels * 8, out_channels, 1)

    fwd = jax.jit(functools.partial(unit_gat4_forward, out_channels=out_channels))
    out = jax.block_until_ready(fwd(adj, x, p1, p2))

    # Reference check (loose tolerance covers bf16 MXU operands).
    y_ref = jax.nn.relu(_gatv2_ref(x, adj, p1))
    y_ref = _gatv2_ref(y_ref, adj, p2).reshape(N, 1, out_channels)

    assert out.shape == (N, 1, out_channels)
    assert bool(jnp.all(jnp.isfinite(out)))
    assert bool(jnp.allclose(out, y_ref, rtol=1e-1, atol=1e-1)), (
        float(jnp.max(jnp.abs(out - y_ref))))
    print("KERNEL_OK")
</pallas_src>

<mosaic_0001>
module attributes {stable_mosaic.version = 11 : i64} {
  func.func @_gatv2_row_kernel(%arg0: i32, %arg1: memref<16x16xf32, #tpu.memory_space<vmem>>, %arg2: memref<8x16xf32, #tpu.memory_space<vmem>>, %arg3: memref<8x16x1xf32, #tpu.memory_space<vmem>>, %arg4: memref<16x128xbf16, #tpu.memory_space<vmem>>, %arg5: memref<1x128xf32, #tpu.memory_space<vmem>>, %arg6: memref<16x256xbf16, #tpu.memory_space<vmem>>, %arg7: memref<1x256xf32, #tpu.memory_space<vmem>>, %arg8: memref<128x128xbf16, #tpu.memory_space<vmem>>, %arg9: memref<8x128xf32, #tpu.memory_space<vmem>>) attributes {dimension_semantics = [#tpu.dimension_semantics<parallel>], iteration_bounds = array<i64: 2>, scalar_prefetch = 0 : i64, scratch_operands = 0 : i64, tpu.core_type = #tpu.core_type<tc>, window_params = [{pipeline_mode = #tpu.pipeline_mode<synchronous>, transform_indices = @transform_0, window_bounds = array<i64: 16, 16>}, {transform_indices = @transform_1, window_bounds = array<i64: 8, 16>}, {transform_indices = @transform_2, window_bounds = array<i64: 8, 16, 1>}, {pipeline_mode = #tpu.pipeline_mode<synchronous>, transform_indices = @transform_3, window_bounds = array<i64: 16, 128>}, {pipeline_mode = #tpu.pipeline_mode<synchronous>, transform_indices = @transform_4, window_bounds = array<i64: 1, 128>}, {pipeline_mode = #tpu.pipeline_mode<synchronous>, transform_indices = @transform_5, window_bounds = array<i64: 16, 256>}, {pipeline_mode = #tpu.pipeline_mode<synchronous>, transform_indices = @transform_6, window_bounds = array<i64: 1, 256>}, {pipeline_mode = #tpu.pipeline_mode<synchronous>, transform_indices = @transform_7, window_bounds = array<i64: 128, 128>}, {transform_indices = @transform_8, window_bounds = array<i64: 8, 128>}]} {
    %c0 = arith.constant 0 : index
    %c0_0 = arith.constant 0 : index
    %0 = vector.load %arg1[%c0, %c0_0] : memref<16x16xf32, #tpu.memory_space<vmem>>, vector<16x16xf32>
    %1 = arith.truncf %0 : vector<16x16xf32> to vector<16x16xbf16>
    %c0_1 = arith.constant 0 : index
    %c0_2 = arith.constant 0 : index
    %2 = vector.load %arg4[%c0_1, %c0_2] : memref<16x128xbf16, #tpu.memory_space<vmem>>, vector<16x128xbf16>
    %cst = arith.constant dense<0.000000e+00> : vector<16x128xf32>
    %3 = tpu.matmul %1, %2, %cst {dimension_numbers = #tpu.dot_dimension_numbers<[1], [0], [0], [1], [0, 0, 1, 1], [], []>} : vector<16x16xbf16>, vector<16x128xbf16>, vector<16x128xf32> -> vector<16x128xf32>
    %c0_3 = arith.constant 0 : index
    %c0_4 = arith.constant 0 : index
    %4 = vector.load %arg5[%c0_3, %c0_4] : memref<1x128xf32, #tpu.memory_space<vmem>>, vector<1x128xf32>
    %5 = vector.broadcast %4 : vector<1x128xf32> to vector<16x128xf32>
    %6 = arith.addf %3, %5 : vector<16x128xf32>
    %c0_5 = arith.constant 0 : index
    %c0_6 = arith.constant 0 : index
    %7 = vector.load %arg2[%c0_5, %c0_6] : memref<8x16xf32, #tpu.memory_space<vmem>>, vector<8x16xf32>
    %8 = arith.truncf %7 : vector<8x16xf32> to vector<8x16xbf16>
    %c0_7 = arith.constant 0 : index
    %c0_8 = arith.constant 0 : index
    %9 = vector.load %arg6[%c0_7, %c0_8] : memref<16x256xbf16, #tpu.memory_space<vmem>>, vector<16x256xbf16>
    %cst_9 = arith.constant dense<0.000000e+00> : vector<8x256xf32>
    %10 = tpu.matmul %8, %9, %cst_9 {dimension_numbers = #tpu.dot_dimension_numbers<[1], [0], [0], [1], [0, 0, 1, 1], [], []>} : vector<8x16xbf16>, vector<16x256xbf16>, vector<8x256xf32> -> vector<8x256xf32>
    %c0_10 = arith.constant 0 : index
    %c0_11 = arith.constant 0 : index
    %11 = vector.load %arg7[%c0_10, %c0_11] : memref<1x256xf32, #tpu.memory_space<vmem>>, vector<1x256xf32>
    %12 = vector.broadcast %11 : vector<1x256xf32> to vector<8x256xf32>
    %13 = arith.addf %10, %12 : vector<8x256xf32>
    %14 = vector.extract_strided_slice %13 {offsets = [0, 0], sizes = [8, 128], strides = [1, 1]} : vector<8x256xf32> to vector<8x128xf32>
    %15 = vector.extract_strided_slice %13 {offsets = [0, 128], sizes = [8, 128], strides = [1, 1]} : vector<8x256xf32> to vector<8x128xf32>
    %16 = vector.shape_cast %6 : vector<16x128xf32> to vector<1x16x128xf32>
    %17 = vector.shape_cast %14 : vector<8x128xf32> to vector<8x1x128xf32>
    %18 = vector.broadcast %16 : vector<1x16x128xf32> to vector<8x16x128xf32>
    %19 = vector.broadcast %17 : vector<8x1x128xf32> to vector<8x16x128xf32>
    %20 = arith.addf %18, %19 : vector<8x16x128xf32>
    %cst_12 = arith.constant 0.000000e+00 : f32
    %21 = vector.broadcast %cst_12 : f32 to vector<8x16x128xf32>
    %22 = arith.cmpf oge, %20, %21 : vector<8x16x128xf32>
    %cst_13 = arith.constant 2.000000e-01 : f32
    %23 = vector.broadcast %cst_13 : f32 to vector<8x16x128xf32>
    %24 = arith.mulf %23, %20 : vector<8x16x128xf32>
    %25 = arith.select %22, %20, %24 : vector<8x16x128xi1>, vector<8x16x128xf32>
    %26 = vector.shape_cast %25 : vector<8x16x128xf32> to vector<128x128xf32>
    %27 = arith.truncf %26 : vector<128x128xf32> to vector<128x128xbf16>
    %c0_14 = arith.constant 0 : index
    %c0_15 = arith.constant 0 : index
    %28 = vector.load %arg8[%c0_14, %c0_15] : memref<128x128xbf16, #tpu.memory_space<vmem>>, vector<128x128xbf16>
    %cst_16 = arith.constant dense<0.000000e+00> : vector<128x128xf32>
    %29 = tpu.matmul %27, %28, %cst_16 {dimension_numbers = #tpu.dot_dimension_numbers<[1], [0], [0], [1], [0, 0, 1, 1], [], []>} : vector<128x128xbf16>, vector<128x128xbf16>, vector<128x128xf32> -> vector<128x128xf32>
    %30 = vector.shape_cast %29 : vector<128x128xf32> to vector<8x16x128xf32>
    %c0_17 = arith.constant 0 : index
    %c0_18 = arith.constant 0 : index
    %c0_19 = arith.constant 0 : index
    %31 = vector.load %arg3[%c0_17, %c0_18, %c0_19] : memref<8x16x1xf32, #tpu.memory_space<vmem>>, vector<8x16x1xf32>
    %cst_20 = arith.constant 0.000000e+00 : f32
    %32 = vector.broadcast %cst_20 : f32 to vector<8x16x1xf32>
    %33 = arith.cmpf ogt, %31, %32 : vector<8x16x1xf32>
    %cst_21 = arith.constant -1.000000e+30 : f32
    %34 = vector.shape_cast %33 : vector<8x16x1xi1> to vector<8x16x1xi1>
    %35 = vector.broadcast %34 : vector<8x16x1xi1> to vector<8x16x128xi1>
    %36 = vector.broadcast %cst_21 : f32 to vector<8x16x128xf32>
    %37 = arith.select %35, %30, %36 : vector<8x16x128xi1>, vector<8x16x128xf32>
    %cst_22 = arith.constant dense<0xFF800000> : vector<8x128xf32>
    %38 = vector.multi_reduction <maximumf>, %37, %cst_22 [1] : vector<8x16x128xf32> to vector<8x128xf32>
    %39 = vector.shape_cast %38 : vector<8x128xf32> to vector<8x1x128xf32>
    %40 = vector.broadcast %39 : vector<8x1x128xf32> to vector<8x16x128xf32>
    %41 = arith.subf %30, %40 : vector<8x16x128xf32>
    %42 = math.exp %41 : vector<8x16x128xf32>
    %cst_23 = arith.constant 0.000000e+00 : f32
    %43 = vector.shape_cast %33 : vector<8x16x1xi1> to vector<8x16x1xi1>
    %44 = vector.broadcast %43 : vector<8x16x1xi1> to vector<8x16x128xi1>
    %45 = vector.broadcast %cst_23 : f32 to vector<8x16x128xf32>
    %46 = arith.select %44, %42, %45 : vector<8x16x128xi1>, vector<8x16x128xf32>
    %47 = vector.shape_cast %6 : vector<16x128xf32> to vector<1x16x128xf32>
    %48 = vector.broadcast %47 : vector<1x16x128xf32> to vector<8x16x128xf32>
    %49 = arith.mulf %46, %48 : vector<8x16x128xf32>
    %cst_24 = arith.constant dense<0.000000e+00> : vector<8x128xf32>
    %50 = vector.multi_reduction <add>, %49, %cst_24 [1] : vector<8x16x128xf32> to vector<8x128xf32>
    %cst_25 = arith.constant dense<0.000000e+00> : vector<8x128xf32>
    %51 = vector.multi_reduction <add>, %46, %cst_25 [1] : vector<8x16x128xf32> to vector<8x128xf32>
    %cst_26 = arith.constant 9.99999968E-21 : f32
    %52 = vector.broadcast %cst_26 : f32 to vector<8x128xf32>
    %53 = arith.maximumf %51, %52 : vector<8x128xf32>
    %54 = tpu.reciprocal %53 : vector<8x128xf32> -> vector<8x128xf32>
    %55 = arith.mulf %50, %54 : vector<8x128xf32>
    %56 = arith.addf %55, %15 : vector<8x128xf32>
    %cst_27 = arith.constant 0.000000e+00 : f32
    %57 = vector.broadcast %cst_27 : f32 to vector<8x128xf32>
    %58 = arith.maximumf %56, %57 : vector<8x128xf32>
    %c0_28 = arith.constant 0 : index
    %c0_29 = arith.constant 0 : index
    %59 = vector.load %arg9[%c0_28, %c0_29] : memref<8x128xf32, #tpu.memory_space<vmem>>, vector<8x128xf32>
    tpu.vector_store %arg9[%c0_28, %c0_29], %58 {strides = array<i32>} : memref<8x128xf32, #tpu.memory_space<vmem>>, vector<8x128xf32>,
    return
  }
  func.func @transform_0(%arg0: i32) -> (i32, i32) {
    %c0_i32 = arith.constant 0 : i32
    %c0_i32_0 = arith.constant 0 : i32
    %c0_i32_1 = arith.constant 0 : i32
    return %c0_i32, %c0_i32_0 : i32, i32
  }
  func.func @transform_1(%arg0: i32) -> (i32, i32) {
    %c0_i32 = arith.constant 0 : i32
    %c0_i32_0 = arith.constant 0 : i32
    return %arg0, %c0_i32 : i32, i32
  }
  func.func @transform_2(%arg0: i32) -> (i32, i32, i32) {
    %c0_i32 = arith.constant 0 : i32
    %c0_i32_0 = arith.constant 0 : i32
    %c0_i32_1 = arith.constant 0 : i32
    return %arg0, %c0_i32, %c0_i32_0 : i32, i32, i32
  }
  func.func @transform_3(%arg0: i32) -> (i32, i32) {
    %c0_i32 = arith.constant 0 : i32
    %c0_i32_0 = arith.constant 0 : i32
    %c0_i32_1 = arith.constant 0 : i32
    return %c0_i32, %c0_i32_0 : i32, i32
  }
  func.func @transform_4(%arg0: i32) -> (i32, i32) {
    %c0_i32 = arith.constant 0 : i32
    %c0_i32_0 = arith.constant 0 : i32
    %c0_i32_1 = arith.constant 0 : i32
    return %c0_i32, %c0_i32_0 : i32, i32
  }
  func.func @transform_5(%arg0: i32) -> (i32, i32) {
    %c0_i32 = arith.constant 0 : i32
    %c0_i32_0 = arith.constant 0 : i32
    %c0_i32_1 = arith.constant 0 : i32
    return %c0_i32, %c0_i32_0 : i32, i32
  }
  func.func @transform_6(%arg0: i32) -> (i32, i32) {
    %c0_i32 = arith.constant 0 : i32
    %c0_i32_0 = arith.constant 0 : i32
    %c0_i32_1 = arith.constant 0 : i32
    return %c0_i32, %c0_i32_0 : i32, i32
  }
  func.func @transform_7(%arg0: i32) -> (i32, i32) {
    %c0_i32 = arith.constant 0 : i32
    %c0_i32_0 = arith.constant 0 : i32
    %c0_i32_1 = arith.constant 0 : i32
    return %c0_i32, %c0_i32_0 : i32, i32
  }
  func.func @transform_8(%arg0: i32) -> (i32, i32) {
    %c0_i32 = arith.constant 0 : i32
    %c0_i32_0 = arith.constant 0 : i32
    return %arg0, %c0_i32 : i32, i32
  }
}

module attributes {stable_mosaic.version = 11 : i64} {
  func.func @_gatv2_row_kernel(%arg0: i32, %arg1: memref<16x128xf32, #tpu.memory_space<vmem>>, %arg2: memref<8x128xf32, #tpu.memory_space<vmem>>, %arg3: memref<8x16x1xf32, #tpu.memory_space<vmem>>, %arg4: memref<128x128xbf16, #tpu.memory_space<vmem>>, %arg5: memref<1x128xf32, #tpu.memory_space<vmem>>, %arg6: memref<128x256xbf16, #tpu.memory_space<vmem>>, %arg7: memref<1x256xf32, #tpu.memory_space<vmem>>, %arg8: memref<128x128xbf16, #tpu.memory_space<vmem>>, %arg9: memref<8x128xf32, #tpu.memory_space<vmem>>) attributes {dimension_semantics = [#tpu.dimension_semantics<parallel>], iteration_bounds = array<i64: 2>, scalar_prefetch = 0 : i64, scratch_operands = 0 : i64, tpu.core_type = #tpu.core_type<tc>, window_params = [{pipeline_mode = #tpu.pipeline_mode<synchronous>, transform_indices = @transform_0, window_bounds = array<i64: 16, 128>}, {transform_indices = @transform_1, window_bounds = array<i64: 8, 128>}, {transform_indices = @transform_2, window_bounds = array<i64: 8, 16, 1>}, {pipeline_mode = #tpu.pipeline_mode<synchronous>, transform_indices = @transform_3, window_bounds = array<i64: 128, 128>}, {pipeline_mode = #tpu.pipeline_mode<synchronous>, transform_indices = @transform_4, window_bounds = array<i64: 1, 128>}, {pipeline_mode = #tpu.pipeline_mode<synchronous>, transform_indices = @transform_5, window_bounds = array<i64: 128, 256>}, {pipeline_mode = #tpu.pipeline_mode<synchronous>, transform_indices = @transform_6, window_bounds = array<i64: 1, 256>}, {pipeline_mode = #tpu.pipeline_mode<synchronous>, transform_indices = @transform_7, window_bounds = array<i64: 128, 128>}, {transform_indices = @transform_8, window_bounds = array<i64: 8, 128>}]} {
    %c0 = arith.constant 0 : index
    %c0_0 = arith.constant 0 : index
    %0 = vector.load %arg1[%c0, %c0_0] : memref<16x128xf32, #tpu.memory_space<vmem>>, vector<16x128xf32>
    %1 = arith.truncf %0 : vector<16x128xf32> to vector<16x128xbf16>
    %c0_1 = arith.constant 0 : index
    %c0_2 = arith.constant 0 : index
    %2 = vector.load %arg4[%c0_1, %c0_2] : memref<128x128xbf16, #tpu.memory_space<vmem>>, vector<128x128xbf16>
    %cst = arith.constant dense<0.000000e+00> : vector<16x128xf32>
    %3 = tpu.matmul %1, %2, %cst {dimension_numbers = #tpu.dot_dimension_numbers<[1], [0], [0], [1], [0, 0, 1, 1], [], []>} : vector<16x128xbf16>, vector<128x128xbf16>, vector<16x128xf32> -> vector<16x128xf32>
    %c0_3 = arith.constant 0 : index
    %c0_4 = arith.constant 0 : index
    %4 = vector.load %arg5[%c0_3, %c0_4] : memref<1x128xf32, #tpu.memory_space<vmem>>, vector<1x128xf32>
    %5 = vector.broadcast %4 : vector<1x128xf32> to vector<16x128xf32>
    %6 = arith.addf %3, %5 : vector<16x128xf32>
    %c0_5 = arith.constant 0 : index
    %c0_6 = arith.constant 0 : index
    %7 = vector.load %arg2[%c0_5, %c0_6] : memref<8x128xf32, #tpu.memory_space<vmem>>, vector<8x128xf32>
    %8 = arith.truncf %7 : vector<8x128xf32> to vector<8x128xbf16>
    %c0_7 = arith.constant 0 : index
    %c0_8 = arith.constant 0 : index
    %9 = vector.load %arg6[%c0_7, %c0_8] : memref<128x256xbf16, #tpu.memory_space<vmem>>, vector<128x256xbf16>
    %cst_9 = arith.constant dense<0.000000e+00> : vector<8x256xf32>
    %10 = tpu.matmul %8, %9, %cst_9 {dimension_numbers = #tpu.dot_dimension_numbers<[1], [0], [0], [1], [0, 0, 1, 1], [], []>} : vector<8x128xbf16>, vector<128x256xbf16>, vector<8x256xf32> -> vector<8x256xf32>
    %c0_10 = arith.constant 0 : index
    %c0_11 = arith.constant 0 : index
    %11 = vector.load %arg7[%c0_10, %c0_11] : memref<1x256xf32, #tpu.memory_space<vmem>>, vector<1x256xf32>
    %12 = vector.broadcast %11 : vector<1x256xf32> to vector<8x256xf32>
    %13 = arith.addf %10, %12 : vector<8x256xf32>
    %14 = vector.extract_strided_slice %13 {offsets = [0, 0], sizes = [8, 128], strides = [1, 1]} : vector<8x256xf32> to vector<8x128xf32>
    %15 = vector.extract_strided_slice %13 {offsets = [0, 128], sizes = [8, 128], strides = [1, 1]} : vector<8x256xf32> to vector<8x128xf32>
    %16 = vector.shape_cast %6 : vector<16x128xf32> to vector<1x16x128xf32>
    %17 = vector.shape_cast %14 : vector<8x128xf32> to vector<8x1x128xf32>
    %18 = vector.broadcast %16 : vector<1x16x128xf32> to vector<8x16x128xf32>
    %19 = vector.broadcast %17 : vector<8x1x128xf32> to vector<8x16x128xf32>
    %20 = arith.addf %18, %19 : vector<8x16x128xf32>
    %cst_12 = arith.constant 0.000000e+00 : f32
    %21 = vector.broadcast %cst_12 : f32 to vector<8x16x128xf32>
    %22 = arith.cmpf oge, %20, %21 : vector<8x16x128xf32>
    %cst_13 = arith.constant 2.000000e-01 : f32
    %23 = vector.broadcast %cst_13 : f32 to vector<8x16x128xf32>
    %24 = arith.mulf %23, %20 : vector<8x16x128xf32>
    %25 = arith.select %22, %20, %24 : vector<8x16x128xi1>, vector<8x16x128xf32>
    %26 = vector.shape_cast %25 : vector<8x16x128xf32> to vector<128x128xf32>
    %27 = arith.truncf %26 : vector<128x128xf32> to vector<128x128xbf16>
    %c0_14 = arith.constant 0 : index
    %c0_15 = arith.constant 0 : index
    %28 = vector.load %arg8[%c0_14, %c0_15] : memref<128x128xbf16, #tpu.memory_space<vmem>>, vector<128x128xbf16>
    %cst_16 = arith.constant dense<0.000000e+00> : vector<128x128xf32>
    %29 = tpu.matmul %27, %28, %cst_16 {dimension_numbers = #tpu.dot_dimension_numbers<[1], [0], [0], [1], [0, 0, 1, 1], [], []>} : vector<128x128xbf16>, vector<128x128xbf16>, vector<128x128xf32> -> vector<128x128xf32>
    %30 = vector.shape_cast %29 : vector<128x128xf32> to vector<8x16x128xf32>
    %c0_17 = arith.constant 0 : index
    %c0_18 = arith.constant 0 : index
    %c0_19 = arith.constant 0 : index
    %31 = vector.load %arg3[%c0_17, %c0_18, %c0_19] : memref<8x16x1xf32, #tpu.memory_space<vmem>>, vector<8x16x1xf32>
    %cst_20 = arith.constant 0.000000e+00 : f32
    %32 = vector.broadcast %cst_20 : f32 to vector<8x16x1xf32>
    %33 = arith.cmpf ogt, %31, %32 : vector<8x16x1xf32>
    %cst_21 = arith.constant -1.000000e+30 : f32
    %34 = vector.shape_cast %33 : vector<8x16x1xi1> to vector<8x16x1xi1>
    %35 = vector.broadcast %34 : vector<8x16x1xi1> to vector<8x16x128xi1>
    %36 = vector.broadcast %cst_21 : f32 to vector<8x16x128xf32>
    %37 = arith.select %35, %30, %36 : vector<8x16x128xi1>, vector<8x16x128xf32>
    %cst_22 = arith.constant dense<0xFF800000> : vector<8x128xf32>
    %38 = vector.multi_reduction <maximumf>, %37, %cst_22 [1] : vector<8x16x128xf32> to vector<8x128xf32>
    %39 = vector.shape_cast %38 : vector<8x128xf32> to vector<8x1x128xf32>
    %40 = vector.broadcast %39 : vector<8x1x128xf32> to vector<8x16x128xf32>
    %41 = arith.subf %30, %40 : vector<8x16x128xf32>
    %42 = math.exp %41 : vector<8x16x128xf32>
    %cst_23 = arith.constant 0.000000e+00 : f32
    %43 = vector.shape_cast %33 : vector<8x16x1xi1> to vector<8x16x1xi1>
    %44 = vector.broadcast %43 : vector<8x16x1xi1> to vector<8x16x128xi1>
    %45 = vector.broadcast %cst_23 : f32 to vector<8x16x128xf32>
    %46 = arith.select %44, %42, %45 : vector<8x16x128xi1>, vector<8x16x128xf32>
    %47 = vector.shape_cast %6 : vector<16x128xf32> to vector<1x16x128xf32>
    %48 = vector.broadcast %47 : vector<1x16x128xf32> to vector<8x16x128xf32>
    %49 = arith.mulf %46, %48 : vector<8x16x128xf32>
    %cst_24 = arith.constant dense<0.000000e+00> : vector<8x128xf32>
    %50 = vector.multi_reduction <add>, %49, %cst_24 [1] : vector<8x16x128xf32> to vector<8x128xf32>
    %cst_25 = arith.constant dense<0.000000e+00> : vector<8x128xf32>
    %51 = vector.multi_reduction <add>, %46, %cst_25 [1] : vector<8x16x128xf32> to vector<8x128xf32>
    %cst_26 = arith.constant 9.99999968E-21 : f32
    %52 = vector.broadcast %cst_26 : f32 to vector<8x128xf32>
    %53 = arith.maximumf %51, %52 : vector<8x128xf32>
    %54 = tpu.reciprocal %53 : vector<8x128xf32> -> vector<8x128xf32>
    %55 = arith.mulf %50, %54 : vector<8x128xf32>
    %56 = arith.addf %55, %15 : vector<8x128xf32>
    %c0_27 = arith.constant 0 : index
    %c0_28 = arith.constant 0 : index
    %57 = vector.load %arg9[%c0_27, %c0_28] : memref<8x128xf32, #tpu.memory_space<vmem>>, vector<8x128xf32>
    tpu.vector_store %arg9[%c0_27, %c0_28], %56 {strides = array<i32>} : memref<8x128xf32, #tpu.memory_space<vmem>>, vector<8x128xf32>,
    return
  }
  func.func @transform_0(%arg0: i32) -> (i32, i32) {
    %c0_i32 = arith.constant 0 : i32
    %c0_i32_0 = arith.constant 0 : i32
    %c0_i32_1 = arith.constant 0 : i32
    return %c0_i32, %c0_i32_0 : i32, i32
  }
  func.func @transform_1(%arg0: i32) -> (i32, i32) {
    %c0_i32 = arith.constant 0 : i32
    %c0_i32_0 = arith.constant 0 : i32
    return %arg0, %c0_i32 : i32, i32
  }
  func.func @transform_2(%arg0: i32) -> (i32, i32, i32) {
    %c0_i32 = arith.constant 0 : i32
    %c0_i32_0 = arith.constant 0 : i32
    %c0_i32_1 = arith.constant 0 : i32
    return %arg0, %c0_i32, %c0_i32_0 : i32, i32, i32
  }
  func.func @transform_3(%arg0: i32) -> (i32, i32) {
    %c0_i32 = arith.constant 0 : i32
    %c0_i32_0 = arith.constant 0 : i32
    %c0_i32_1 = arith.constant 0 : i32
    return %c0_i32, %c0_i32_0 : i32, i32
  }
  func.func @transform_4(%arg0: i32) -> (i32, i32) {
    %c0_i32 = arith.constant 0 : i32
    %c0_i32_0 = arith.constant 0 : i32
    %c0_i32_1 = arith.constant 0 : i32
    return %c0_i32, %c0_i32_0 : i32, i32
  }
  func.func @transform_5(%arg0: i32) -> (i32, i32) {
    %c0_i32 = arith.constant 0 : i32
    %c0_i32_0 = arith.constant 0 : i32
    %c0_i32_1 = arith.constant 0 : i32
    return %c0_i32, %c0_i32_0 : i32, i32
  }
  func.func @transform_6(%arg0: i32) -> (i32, i32) {
    %c0_i32 = arith.constant 0 : i32
    %c0_i32_0 = arith.constant 0 : i32
    %c0_i32_1 = arith.constant 0 : i32
    return %c0_i32, %c0_i32_0 : i32, i32
  }
  func.func @transform_7(%arg0: i32) -> (i32, i32) {
    %c0_i32 = arith.constant 0 : i32
    %c0_i32_0 = arith.constant 0 : i32
    %c0_i32_1 = arith.constant 0 : i32
    return %c0_i32, %c0_i32_0 : i32, i32
  }
  func.func @transform_8(%arg0: i32) -> (i32, i32) {
    %c0_i32 = arith.constant 0 : i32
    %c0_i32_0 = arith.constant 0 : i32
    return %arg0, %c0_i32 : i32, i32
  }
}

</mosaic_0001>

<llo_original>
// kernel: unit_gat4_forward.2
$region0: #{unit_gat4_forward.2}
  #allocation0 [shape = 'u32[]', space=smem, size = 0x4, offset = 0x4, fixed_abs, tag = 'smem constant byte address 0x4 - core index']
  #allocation1 [shape = 'u32[144,128]{1,0:T(1,128)}', space=vmem, size = 0x12000, scoped, tag = 'internal scratch']
  %s0 = inlined_call_operand.vmem [shape: f32[16,16], index: 0, kind: input, shape index: {}, may-alias: {0,1}]
  %s1 = inlined_call_operand.vmem [shape: f32[16,16], index: 1, kind: input, shape index: {}, may-alias: {0,1}]
  %s2 = inlined_call_operand.vmem [shape: f32[16,16,1], index: 2, kind: input, shape index: {}]
  %s3 = inlined_call_operand.vmem [shape: bf16[16,128], index: 3, kind: input, shape index: {}]
  %s4 = inlined_call_operand.vmem [shape: f32[1,128], index: 4, kind: input, shape index: {}]
  %s5 = inlined_call_operand.vmem [shape: bf16[16,256], index: 5, kind: input, shape index: {}]
  %s6 = inlined_call_operand.vmem [shape: f32[1,256], index: 6, kind: input, shape index: {}]
  %s7 = inlined_call_operand.vmem [shape: bf16[128,128], index: 7, kind: input, shape index: {}]
  %s8 = inlined_call_operand.vmem [shape: f32[16,128], index: 8, kind: output, shape index: {}]
  %s9 = sld [smem:[#allocation0]]
  $region65: #{unit_gat4_forward.2} parent=0
    _
  %s11 = ssub.s32 1, %s9
  %s12 = scalar_select 0, %s11, %s9
  loop: start=0, step=1, limit=4
  $region2: #{unit_gat4_forward.2} parent=0 // loop_pre_header
    _
  $region3: #{unit_gat4_forward.2} parent=0 // loop_header
    %s14 = sphi 0, %s18
    %p15 = scmp.ge.s32.totalorder %s14, 4
    %s22 = sphi 0, %s22
    %s24 = sphi 0, %s22
    %s25 = sphi 0, %s24
    %s39 = sphi 0, %s25
    %s45 = sphi 0, %s47
    %s48 = sphi 0, %s45
    %s49 = sphi 0, %s48
    %s65 = sphi 0, %s49
    %s71 = sphi 0, %s73
    %s74 = sphi 0, %s71
    %s75 = sphi 0, %s74
    %s91 = sphi 0, %s75
    %s95 = sphi 0, %s95
    %s97 = sphi 0, %s95
    %s98 = sphi 0, %s97
    %s112 = sphi 0, %s98
    %s116 = sphi 0, %s116
    %s118 = sphi 0, %s116
    %s119 = sphi 0, %s118
    %s133 = sphi 0, %s119
    %s137 = sphi 0, %s137
    %s139 = sphi 0, %s137
    %s140 = sphi 0, %s139
    %s154 = sphi 0, %s140
    %s158 = sphi 0, %s158
    %s160 = sphi 0, %s158
    %s161 = sphi 0, %s160
    %s175 = sphi 0, %s161
    %s179 = sphi 0, %s179
    %s181 = sphi 0, %s179
    %s182 = sphi 0, %s181
    %s196 = sphi 0, %s182
    %s202 = sphi 0, %s204
    %s205 = sphi 0, %s202
    %s206 = sphi 0, %s205
    %s222 = sphi 0, %s206
  $region4: #{unit_gat4_forward.2} parent=0 // loop_header_branch
    %17 = sbr.rel (%p15) target = $region8
  $region5: #{unit_gat4_forward.2} parent=0 // loop_body
    %s19 = ssub.s32 %s14, 1
    %s20 = ssub.s32 %s14, 2
    %s21 = sadd.s32 %s14, 1
    %s23 = sadd.s32 %s22, 1
    %p26 = scmp.eq.s32.totalorder %s14, 1
    %p27 = scmp.ne.s32.totalorder %s22, %s24
    %p28 = scmp.eq.s32.totalorder %s14, 0
    %p29 = por %p27, %p28
    %p30 = scmp.ne.s32.totalorder %s22, %s24
    %p31 = scmp.eq.s32.totalorder %s19, 1
    %p32 = por %p30, %p31
    %p33 = scmp.ne.s32.totalorder %s24, %s25
    %p34 = scmp.eq.s32.totalorder %s19, 0
    %p35 = por %p33, %p34
    %p36 = scmp.ne.s32.totalorder %s24, %s25
    %p37 = scmp.eq.s32.totalorder %s20, 1
    %p38 = por %p36, %p37
    %p40 = scmp.ne.s32.totalorder %s25, %s39
    %p41 = scmp.eq.s32.totalorder %s20, 0
    %p42 = por %p40, %p41
    %s43 = ssub.s32 %s14, %s21
    %p44 = scmp.eq.s32.totalorder %s43, 0
    %s46 = sadd.s32 %s45, 1
    %s47 = scalar_select %p44, %s45, %s46
    %p50 = pneg %p44
    %p51 = scmp.eq.s32.totalorder %s14, 1
    %p52 = por %p50, %p51
    %p53 = scmp.ne.s32.totalorder %s45, %s48
    %p54 = scmp.eq.s32.totalorder %s14, 0
    %p55 = por %p53, %p54
    %p56 = scmp.ne.s32.totalorder %s45, %s48
    %p57 = scmp.eq.s32.totalorder %s19, 1
    %p58 = por %p56, %p57
    %p59 = scmp.ne.s32.totalorder %s48, %s49
    %p60 = scmp.eq.s32.totalorder %s19, 0
    %p61 = por %p59, %p60
    %p62 = scmp.ne.s32.totalorder %s48, %s49
    %p63 = scmp.eq.s32.totalorder %s20, 1
    %p64 = por %p62, %p63
    %p66 = scmp.ne.s32.totalorder %s49, %s65
    %p67 = scmp.eq.s32.totalorder %s20, 0
    %p68 = por %p66, %p67
    %s69 = ssub.s32 %s14, %s21
    %p70 = scmp.eq.s32.totalorder %s69, 0
    %s72 = sadd.s32 %s71, 1
    %s73 = scalar_select %p70, %s71, %s72
    %p76 = pneg %p70
    %p77 = scmp.eq.s32.totalorder %s14, 1
    %p78 = por %p76, %p77
    %p79 = scmp.ne.s32.totalorder %s71, %s74
    %p80 = scmp.eq.s32.totalorder %s14, 0
    %p81 = por %p79, %p80
    %p82 = scmp.ne.s32.totalorder %s71, %s74
    %p83 = scmp.eq.s32.totalorder %s19, 1
    %p84 = por %p82, %p83
    %p85 = scmp.ne.s32.totalorder %s74, %s75
    %p86 = scmp.eq.s32.totalorder %s19, 0
    %p87 = por %p85, %p86
    %p88 = scmp.ne.s32.totalorder %s74, %s75
    %p89 = scmp.eq.s32.totalorder %s20, 1
    %p90 = por %p88, %p89
    %p92 = scmp.ne.s32.totalorder %s75, %s91
    %p93 = scmp.eq.s32.totalorder %s20, 0
    %p94 = por %p92, %p93
    %s96 = sadd.s32 %s95, 1
    %p99 = scmp.eq.s32.totalorder %s14, 1
    %p100 = scmp.ne.s32.totalorder %s95, %s97
    %p101 = scmp.eq.s32.totalorder %s14, 0
    %p102 = por %p100, %p101
    %p103 = scmp.ne.s32.totalorder %s95, %s97
    %p104 = scmp.eq.s32.totalorder %s19, 1
    %p105 = por %p103, %p104
    %p106 = scmp.ne.s32.totalorder %s97, %s98
    %p107 = scmp.eq.s32.totalorder %s19, 0
    %p108 = por %p106, %p107
    %p109 = scmp.ne.s32.totalorder %s97, %s98
    %p110 = scmp.eq.s32.totalorder %s20, 1
    %p111 = por %p109, %p110
    %p113 = scmp.ne.s32.totalorder %s98, %s112
    %p114 = scmp.eq.s32.totalorder %s20, 0
    %p115 = por %p113, %p114
    %s117 = sadd.s32 %s116, 1
    %p120 = scmp.eq.s32.totalorder %s14, 1
    %p121 = scmp.ne.s32.totalorder %s116, %s118
    %p122 = scmp.eq.s32.totalorder %s14, 0
    %p123 = por %p121, %p122
    %p124 = scmp.ne.s32.totalorder %s116, %s118
    %p125 = scmp.eq.s32.totalorder %s19, 1
    %p126 = por %p124, %p125
    %p127 = scmp.ne.s32.totalorder %s118, %s119
    %p128 = scmp.eq.s32.totalorder %s19, 0
    %p129 = por %p127, %p128
    %p130 = scmp.ne.s32.totalorder %s118, %s119
    %p131 = scmp.eq.s32.totalorder %s20, 1
    %p132 = por %p130, %p131
    %p134 = scmp.ne.s32.totalorder %s119, %s133
    %p135 = scmp.eq.s32.totalorder %s20, 0
    %p136 = por %p134, %p135
    %s138 = sadd.s32 %s137, 1
    %p141 = scmp.eq.s32.totalorder %s14, 1
    %p142 = scmp.ne.s32.totalorder %s137, %s139
    %p143 = scmp.eq.s32.totalorder %s14, 0
    %p144 = por %p142, %p143
    %p145 = scmp.ne.s32.totalorder %s137, %s139
    %p146 = scmp.eq.s32.totalorder %s19, 1
    %p147 = por %p145, %p146
    %p148 = scmp.ne.s32.totalorder %s139, %s140
    %p149 = scmp.eq.s32.totalorder %s19, 0
    %p150 = por %p148, %p149
    %p151 = scmp.ne.s32.totalorder %s139, %s140
    %p152 = scmp.eq.s32.totalorder %s20, 1
    %p153 = por %p151, %p152
    %p155 = scmp.ne.s32.totalorder %s140, %s154
    %p156 = scmp.eq.s32.totalorder %s20, 0
    %p157 = por %p155, %p156
    %s159 = sadd.s32 %s158, 1
    %p162 = scmp.eq.s32.totalorder %s14, 1
    %p163 = scmp.ne.s32.totalorder %s158, %s160
    %p164 = scmp.eq.s32.totalorder %s14, 0
    %p165 = por %p163, %p164
    %p166 = scmp.ne.s32.totalorder %s158, %s160
    %p167 = scmp.eq.s32.totalorder %s19, 1
    %p168 = por %p166, %p167
    %p169 = scmp.ne.s32.totalorder %s160, %s161
    %p170 = scmp.eq.s32.totalorder %s19, 0
    %p171 = por %p169, %p170
    %p172 = scmp.ne.s32.totalorder %s160, %s161
    %p173 = scmp.eq.s32.totalorder %s20, 1
    %p174 = por %p172, %p173
    %p176 = scmp.ne.s32.totalorder %s161, %s175
    %p177 = scmp.eq.s32.totalorder %s20, 0
    %p178 = por %p176, %p177
    %s180 = sadd.s32 %s179, 1
    %p183 = scmp.eq.s32.totalorder %s14, 1
    %p184 = scmp.ne.s32.totalorder %s179, %s181
    %p185 = scmp.eq.s32.totalorder %s14, 0
    %p186 = por %p184, %p185
    %p187 = scmp.ne.s32.totalorder %s179, %s181
    %p188 = scmp.eq.s32.totalorder %s19, 1
    %p189 = por %p187, %p188
    %p190 = scmp.ne.s32.totalorder %s181, %s182
    %p191 = scmp.eq.s32.totalorder %s19, 0
    %p192 = por %p190, %p191
    %p193 = scmp.ne.s32.totalorder %s181, %s182
    %p194 = scmp.eq.s32.totalorder %s20, 1
    %p195 = por %p193, %p194
    %p197 = scmp.ne.s32.totalorder %s182, %s196
    %p198 = scmp.eq.s32.totalorder %s20, 0
    %p199 = por %p197, %p198
    %s200 = ssub.s32 %s14, %s21
    %p201 = scmp.eq.s32.totalorder %s200, 0
    %s203 = sadd.s32 %s202, 1
    %s204 = scalar_select %p201, %s202, %s203
    %p207 = pneg %p201
    %p208 = scmp.eq.s32.totalorder %s14, 1
    %p209 = por %p207, %p208
    %p210 = scmp.ne.s32.totalorder %s202, %s205
    %p211 = scmp.eq.s32.totalorder %s14, 0
    %p212 = por %p210, %p211
    %p213 = scmp.ne.s32.totalorder %s202, %s205
    %p214 = scmp.eq.s32.totalorder %s19, 1
    %p215 = por %p213, %p214
    %p216 = scmp.ne.s32.totalorder %s205, %s206
    %p217 = scmp.eq.s32.totalorder %s19, 0
    %p218 = por %p216, %p217
    %p219 = scmp.ne.s32.totalorder %s205, %s206
    %p220 = scmp.eq.s32.totalorder %s20, 1
    %p221 = por %p219, %p220
    %p223 = scmp.ne.s32.totalorder %s206, %s222
    %p224 = scmp.eq.s32.totalorder %s20, 0
    %p225 = por %p223, %p224
    %p226 = scmp.le.s32.totalorder 1, %s14
    %p227 = scmp.lt.s32.totalorder %s14, 3
    %p228 = pnand %p226, %p227
    %p229 = pneg %p228
    // Predicated region
    $region9: #{unit_gat4_forward.2} parent=5 // pred_check
      _
    $region10: #{unit_gat4_forward.2} parent=5 // pred_check_branch
      %231 = sbr.rel (%p228) target = $region12
    $region11: #{unit_gat4_forward.2} parent=5 // pred_region
      %s232 = ssub.s32 %s14, 1
      // Predicated region
      $region13: #{unit_gat4_forward.2} parent=11 // pred_check
        %p233 = pneg %p35
      $region14: #{unit_gat4_forward.2} parent=11 // pred_check_branch
        %235 = sbr.rel (%p233) target = $region16
      $region15: #{unit_gat4_forward.2} parent=11 // pred_region
        _
      $region16: #{unit_gat4_forward.2} parent=11 // pred_fallthru
        _
      // Predicated region
      $region17: #{unit_gat4_forward.2} parent=11 // pred_check
        %p236 = pneg %p108
      $region18: #{unit_gat4_forward.2} parent=11 // pred_check_branch
        %238 = sbr.rel (%p236) target = $region20
      $region19: #{unit_gat4_forward.2} parent=11 // pred_region
        _
      $region20: #{unit_gat4_forward.2} parent=11 // pred_fallthru
        _
      // Predicated region
      $region21: #{unit_gat4_forward.2} parent=11 // pred_check
        %p239 = pneg %p129
      $region22: #{unit_gat4_forward.2} parent=11 // pred_check_branch
        %241 = sbr.rel (%p239) target = $region24
      $region23: #{unit_gat4_forward.2} parent=11 // pred_region
        _
      $region24: #{unit_gat4_forward.2} parent=11 // pred_fallthru
        _
      // Predicated region
      $region25: #{unit_gat4_forward.2} parent=11 // pred_check
        %p242 = pneg %p150
      $region26: #{unit_gat4_forward.2} parent=11 // pred_check_branch
        %244 = sbr.rel (%p242) target = $region28
      $region27: #{unit_gat4_forward.2} parent=11 // pred_region
        _
      $region28: #{unit_gat4_forward.2} parent=11 // pred_fallthru
        _
      // Predicated region
      $region29: #{unit_gat4_forward.2} parent=11 // pred_check
        %p245 = pneg %p171
      $region30: #{unit_gat4_forward.2} parent=11 // pred_check_branch
        %247 = sbr.rel (%p245) target = $region32
      $region31: #{unit_gat4_forward.2} parent=11 // pred_region
        _
      $region32: #{unit_gat4_forward.2} parent=11 // pred_fallthru
        _
      // Predicated region
      $region33: #{unit_gat4_forward.2} parent=11 // pred_check
        %p248 = pneg %p192
      $region34: #{unit_gat4_forward.2} parent=11 // pred_check_branch
        %250 = sbr.rel (%p248) target = $region36
      $region35: #{unit_gat4_forward.2} parent=11 // pred_region
        _
      $region36: #{unit_gat4_forward.2} parent=11 // pred_fallthru
        _
    $region12: #{unit_gat4_forward.2} parent=5 // pred_fallthru
      _
    %p251 = scmp.lt.s32.totalorder %s14, 2
    // Predicated region
    $region37: #{unit_gat4_forward.2} parent=5 // pred_check
      %p252 = pneg %p251
    $region38: #{unit_gat4_forward.2} parent=5 // pred_check_branch
      %254 = sbr.rel (%p252) target = $region40
    $region39: #{unit_gat4_forward.2} parent=5 // pred_region
      // Predicated region
      $region41: #{unit_gat4_forward.2} parent=39 // pred_check
        %p255 = pneg %p55
      $region42: #{unit_gat4_forward.2} parent=39 // pred_check_branch
        %257 = sbr.rel (%p255) target = $region44
      $region43: #{unit_gat4_forward.2} parent=39 // pred_region
        %p258 = scmp.lt.s32.totalorder %s14, 1
        %s259 = scalar_select %p258, %s14, 1
        %s260 = smul.addr %s259, 8
        %s261 = scalar_lea.vmem %s1, %s260
      $region44: #{unit_gat4_forward.2} parent=39 // pred_fallthru
        _
      // Predicated region
      $region45: #{unit_gat4_forward.2} parent=39 // pred_check
        %p262 = pneg %p81
      $region46: #{unit_gat4_forward.2} parent=39 // pred_check_branch
        %264 = sbr.rel (%p262) target = $region48
      $region47: #{unit_gat4_forward.2} parent=39 // pred_region
        %s265 = smul.u32 8, %s14
        %p266 = scmp.lt.s32.totalorder %s265, 15
        %s267 = scalar_select %p266, %s265, 15
        %s268 = smul.addr %s267, 2
        %s269 = smul.addr %s268, 8
        %s270 = scalar_lea.vmem %s2, %s269
        %s271 = smul.u32 8, %s14
      $region48: #{unit_gat4_forward.2} parent=39 // pred_fallthru
        _
    $region40: #{unit_gat4_forward.2} parent=5 // pred_fallthru
      _
    %p272 = scmp.le.s32.totalorder 1, %s14
    %p273 = scmp.lt.s32.totalorder %s14, 3
    %p274 = pnand %p272, %p273
    %p275 = pneg %p274
    // Predicated region
    $region49: #{unit_gat4_forward.2} parent=5 // pred_check
      _
    $region50: #{unit_gat4_forward.2} parent=5 // pred_check_branch
      %277 = sbr.rel (%p274) target = $region52
    $region51: #{unit_gat4_forward.2} parent=5 // pred_region
      %s278 = ssub.s32 %s14, 1
      %p279 = pneg %p35
      %p280 = pneg %p32
      %p281 = scmp.lt.s32.totalorder %s19, 1
      %s282 = scalar_select %p281, %s19, 1
      %s283 = smul.addr %s282, 8
      %s284 = scalar_lea.vmem %s1, %s283
      %p285 = pneg %p61
      %p286 = pneg %p58
      %s287 = smul.u32 8, %s19
      %p288 = scmp.lt.s32.totalorder %s287, 15
      %s289 = scalar_select %p288, %s287, 15
      %s290 = smul.addr %s289, 2
      %s291 = smul.addr %s290, 8
      %s292 = scalar_lea.vmem %s2, %s291
      %p293 = pneg %p87
      %p294 = pneg %p84
      %p295 = pneg %p108
      %p296 = pneg %p105
      %p297 = pneg %p129
      %p298 = pneg %p126
      %p299 = pneg %p150
      %p300 = pneg %p147
      %p301 = pneg %p171
      %p302 = pneg %p168
      %p303 = pneg %p192
      %p304 = pneg %p189
      %p305 = pneg %p218
      %p306 = pneg %p215
      %p307 = scmp.lt.s32.totalorder %s19, 1
      %s308 = scalar_select %p307, %s19, 1
      %s309 = smul.addr %s308, 8
      %s310 = scalar_lea.vmem %s8, %s309
      %p311 = scmp.lt.s32.totalorder %s19, 1
      %s312 = scalar_select %p311, %s19, 1
      %s313 = smul.addr %s312, 8
      %s314 = scalar_lea.vmem %s1, %s313
      %s315 = smul.u32 8, %s19
      %p316 = scmp.lt.s32.totalorder %s315, 15
      %s317 = scalar_select %p316, %s315, 15
      %s318 = smul.addr %s317, 2
      %s319 = smul.addr %s318, 8
      %s320 = scalar_lea.vmem %s2, %s319
      %s321 = smul.u32 8, %s19
      %p322 = scmp.lt.s32.totalorder %s19, 1
      %s323 = scalar_select %p322, %s19, 1
      %s324 = smul.addr %s323, 8
      %s325 = scalar_lea.vmem %s8, %s324
      %v327 = vld [vmem:[%s0] sm:$0xff]
      %v328 = vld [vmem:[%s0 + $0x8] sm:$0xff]
      %v329 = vpack.c.bf16 %v328, %v327
      %v330 = vld [vmem:[%s3] sm:$0xf]
      %v331 = vld [vmem:[%s3 + $0x4] sm:$0xf]
      %v332 = vld [vmem:[%s4] sm:$0x1]
      %v334 = vlaneseq
      %v335 = vshrl.u32 %v334, 7
      %v336 = vsub.s32 0, %v335
      %v337 = vrot.slane %v332, %v336
      %v341 = vunpack.c.l.b16 %v330
      %v342 = vunpack.c.l.b16 %v331
      %v343 = vpack.c.b16 %v342, %v341
      %vm345 = vcmask 130048
      %v347 = vsel %vm345, %v329, 0
      %349 = vmatprep.subr.bf16.mxu0 0
      %350 = vmatpush1.bf16.msra.mxu0 0
      %351 = vmatprep.subr.bf16.mxu0 0
      %352 = vmatpush1.bf16.msra.mxu0 0
      %353 = vmatprep.subr.bf16.mxu0 0
      %354 = vmatpush1.bf16.msra.mxu0 0
      %355 = vmatprep.subr.bf16.mxu0 0
      %356 = vmatpush1.bf16.msra.mxu0 0
      %357 = vmatprep.subr.bf16.mxu0 0
      %358 = vmatpush1.bf16.msra.mxu0 0
      %359 = vmatprep.subr.bf16.mxu0 0
      %360 = vmatpush1.bf16.msra.mxu0 0
      %361 = vmatprep.subr.bf16.mxu0 0
      %362 = vmatpush1.bf16.msra.mxu0 0
      %363 = vmatprep.subr.bf16.mxu0 0
      %364 = vmatpush1.bf16.msra.mxu0 %v343
      %365 = vmatprep.subr.bf16.mxu0 0
      %366 = vmatpush2.bf16.msra.mxu0 0
      %367 = vmatprep.subr.bf16.mxu0 0
      %368 = vmatpush2.bf16.msra.mxu0 0
      %369 = vmatprep.subr.bf16.mxu0 0
      %370 = vmatpush2.bf16.msra.mxu0 0
      %371 = vmatprep.subr.bf16.mxu0 0
      %372 = vmatpush2.bf16.msra.mxu0 0
      %373 = vmatprep.subr.bf16.mxu0 0
      %374 = vmatpush2.bf16.msra.mxu0 0
      %375 = vmatprep.subr.bf16.mxu0 0
      %376 = vmatpush2.bf16.msra.mxu0 0
      %377 = vmatprep.subr.bf16.mxu0 0
      %378 = vmatpush2.bf16.msra.mxu0 0
      %379 = vmatprep.subr.bf16.mxu0 0
      %380 = vmatpush2.bf16.msra.mxu0 0
      %381 = vmatprep.mubr.bf16.mxu0 0
      %382 = vmatmul.mubr.bf16.gmra.mxu0 %v347
      %v383 = vpop.f32.mrf.mxu0
      %v384 = vadd.f32 %v337, %v383
      %v385 = vpop.f32.mrf.mxu0
      %v386 = vpop.f32.mrf.mxu0
      %v387 = vadd.f32 %v337, %v386
      %v388 = vpop.f32.mrf.mxu0
      %389 = vdwg.mxu0
      %v390 = vld [vmem:[%s314] sm:$0xff]
      %v391 = vpack.c.bf16 %v390, %v390
      %v392 = vld [vmem:[%s5] sm:$0xff]
      %v393 = vld [vmem:[%s5 + $0x8] sm:$0xff]
      %v394 = vld [vmem:[%s6] sm:$0x3]
      %v396 = vlaneseq
      %v397 = vshrl.u32 %v396, 7
      %v398 = vsub.s32 0, %v397
      %v399 = vrot.slane %v394, %v398
      %v400 = vlaneseq
      %v401 = vshrl.u32 %v400, 7
      %v402 = vsub.s32 1, %v401
      %v403 = vrot.slane %v394, %v402
      %v408 = vunpack.c.l.b16 %v392
      %v409 = vunpack.c.h.b16 %v392
      %v410 = vunpack.c.l.b16 %v393
      %v411 = vunpack.c.h.b16 %v393
      %v412 = vpack.c.b16 %v410, %v408
      %v413 = vpack.c.b16 %v411, %v409
      %v417 = vsel %vm345, %v391, 0
      %419 = vmatprep.subr.bf16.mxu0 0
      %420 = vmatpush1.bf16.msra.mxu0 0
      %421 = vmatprep.subr.bf16.mxu0 0
      %422 = vmatpush1.bf16.msra.mxu0 0
      %423 = vmatprep.subr.bf16.mxu0 0
      %424 = vmatpush1.bf16.msra.mxu0 0
      %425 = vmatprep.subr.bf16.mxu0 0
      %426 = vmatpush1.bf16.msra.mxu0 0
      %427 = vmatprep.subr.bf16.mxu0 0
      %428 = vmatpush1.bf16.msra.mxu0 0
      %429 = vmatprep.subr.bf16.mxu0 0
      %430 = vmatpush1.bf16.msra.mxu0 0
      %431 = vmatprep.subr.bf16.mxu0 0
      %432 = vmatpush1.bf16.msra.mxu0 0
      %433 = vmatprep.subr.bf16.mxu0 %v413
      %434 = vmatpush1.bf16.msra.mxu0 %v412
      %435 = vmatprep.subr.bf16.mxu0 0
      %436 = vmatpush2.bf16.msra.mxu0 0
      %437 = vmatprep.subr.bf16.mxu0 0
      %438 = vmatpush2.bf16.msra.mxu0 0
      %439 = vmatprep.subr.bf16.mxu0 0
      %440 = vmatpush2.bf16.msra.mxu0 0
      %441 = vmatprep.subr.bf16.mxu0 0
      %442 = vmatpush2.bf16.msra.mxu0 0
      %443 = vmatprep.subr.bf16.mxu0 0
      %444 = vmatpush2.bf16.msra.mxu0 0
      %445 = vmatprep.subr.bf16.mxu0 0
      %446 = vmatpush2.bf16.msra.mxu0 0
      %447 = vmatprep.subr.bf16.mxu0 0
      %448 = vmatpush2.bf16.msra.mxu0 0
      %449 = vmatprep.subr.bf16.mxu0 0
      %450 = vmatpush2.bf16.msra.mxu0 0
      %451 = vmatprep.mubr.bf16.mxu0 0
      %452 = vmatmul.mubr.bf16.gmra.mxu0 %v417
      %v453 = vpop.f32.mrf.mxu0
      %v454 = vadd.f32 %v399, %v453
      %v455 = vpop.f32.mrf.mxu0
      %v456 = vadd.f32 %v403, %v455
      %v457 = vpop.f32.mrf.mxu0
      %v458 = vpop.f32.mrf.mxu0
      %459 = vdwg.mxu0
      %v461 = vcombine.high %v454, %v454
      %v463 = vunpack.c.l.s4 1966171168
      %v464 = vunpack.c.0.s8 %v463
      %v465 = vlaneseq
      %v466 = vshrl.u32 %v465, 7
      %v467 = vsub.s32 %v464, %v466
      %v468 = vrot.slane %v454, %v467
      %v470 = vunpack.c.l.s4 1966171168
      %v471 = vunpack.c.0.s8 %v470
      %v472 = vlaneseq
      %v473 = vshrl.u32 %v472, 7
      %v474 = vsub.s32 %v471, %v473
      %v475 = vrot.slane %v461, %v474
      %v476 = vcombine.high %v468, %v468
      %v477 = vcombine.high %v475, %v475
      %v479 = vunpack.c.l.s4 1966171168
      %v480 = vunpack.c.0.s8 %v479
      %v481 = vlaneseq
      %v482 = vshrl.u32 %v481, 7
      %v483 = vsub.s32 %v480, %v482
      %v484 = vrot.slane %v468, %v483
      %v486 = vunpack.c.l.s4 1966171168
      %v487 = vunpack.c.0.s8 %v486
      %v488 = vlaneseq
      %v489 = vshrl.u32 %v488, 7
      %v490 = vsub.s32 %v487, %v489
      %v491 = vrot.slane %v475, %v490
      %v493 = vunpack.c.l.s4 1966171168
      %v494 = vunpack.c.0.s8 %v493
      %v495 = vlaneseq
      %v496 = vshrl.u32 %v495, 7
      %v497 = vsub.s32 %v494, %v496
      %v498 = vrot.slane %v476, %v497
      %v500 = vunpack.c.l.s4 1966171168
      %v501 = vunpack.c.0.s8 %v500
      %v502 = vlaneseq
      %v503 = vshrl.u32 %v502, 7
      %v504 = vsub.s32 %v501, %v503
      %v505 = vrot.slane %v477, %v504
      %v506 = vcombine.high %v484, %v484
      %v507 = vcombine.high %v491, %v491
      %v508 = vcombine.high %v498, %v498
      %v509 = vcombine.high %v505, %v505
      %v510 = vlaneseq
      %v511 = vshrl.u32 %v510, 7
      %v512 = vsub.s32 0, %v511
      %v513 = vrot.slane %v484, %v512
      %v514 = vlaneseq
      %v515 = vshrl.u32 %v514, 7
      %v516 = vsub.s32 0, %v515
      %v517 = vrot.slane %v498, %v516
      %v518 = vlaneseq
      %v519 = vshrl.u32 %v518, 7
      %v520 = vsub.s32 0, %v519
      %v521 = vrot.slane %v506, %v520
      %v522 = vlaneseq
      %v523 = vshrl.u32 %v522, 7
      %v524 = vsub.s32 0, %v523
      %v525 = vrot.slane %v508, %v524
      %v526 = vlaneseq
      %v527 = vshrl.u32 %v526, 7
      %v528 = vsub.s32 0, %v527
      %v529 = vrot.slane %v491, %v528
      %v530 = vlaneseq
      %v531 = vshrl.u32 %v530, 7
      %v532 = vsub.s32 0, %v531
      %v533 = vrot.slane %v505, %v532
      %v534 = vlaneseq
      %v535 = vshrl.u32 %v534, 7
      %v536 = vsub.s32 0, %v535
      %v537 = vrot.slane %v507, %v536
      %v538 = vlaneseq
      %v539 = vshrl.u32 %v538, 7
      %v540 = vsub.s32 0, %v539
      %v541 = vrot.slane %v509, %v540
      %v550 = vadd.f32 %v384, %v513
      %v551 = vadd.f32 %v387, %v513
      %v552 = vadd.f32 %v384, %v517
      %v553 = vadd.f32 %v387, %v517
      %v554 = vadd.f32 %v384, %v521
      %v555 = vadd.f32 %v387, %v521
      %v556 = vadd.f32 %v384, %v525
      %v557 = vadd.f32 %v387, %v525
      %v558 = vadd.f32 %v384, %v529
      %v559 = vadd.f32 %v387, %v529
      %v560 = vadd.f32 %v384, %v533
      %v561 = vadd.f32 %v387, %v533
      %v562 = vadd.f32 %v384, %v537
      %v563 = vadd.f32 %v387, %v537
      %v564 = vadd.f32 %v384, %v541
      %v565 = vadd.f32 %v387, %v541
      %vm566 = vcmp.ge.f32.partialorder %v550, 0.0
      %vm567 = vcmp.ge.f32.partialorder %v551, 0.0
      %vm568 = vcmp.ge.f32.partialorder %v552, 0.0
      %vm569 = vcmp.ge.f32.partialorder %v553, 0.0
      %vm570 = vcmp.ge.f32.partialorder %v554, 0.0
      %vm571 = vcmp.ge.f32.partialorder %v555, 0.0
      %vm572 = vcmp.ge.f32.partialorder %v556, 0.0
      %vm573 = vcmp.ge.f32.partialorder %v557, 0.0
      %vm574 = vcmp.ge.f32.partialorder %v558, 0.0
      %vm575 = vcmp.ge.f32.partialorder %v559, 0.0
      %vm576 = vcmp.ge.f32.partialorder %v560, 0.0
      %vm577 = vcmp.ge.f32.partialorder %v561, 0.0
      %vm578 = vcmp.ge.f32.partialorder %v562, 0.0
      %vm579 = vcmp.ge.f32.partialorder %v563, 0.0
      %vm580 = vcmp.ge.f32.partialorder %v564, 0.0
      %vm581 = vcmp.ge.f32.partialorder %v565, 0.0
      %v582 = vmul.f32 %v550, 0.2
      %v583 = vmul.f32 %v551, 0.2
      %v584 = vmul.f32 %v552, 0.2
      %v585 = vmul.f32 %v553, 0.2
      %v586 = vmul.f32 %v554, 0.2
      %v587 = vmul.f32 %v555, 0.2
      %v588 = vmul.f32 %v556, 0.2
      %v589 = vmul.f32 %v557, 0.2
      %v590 = vmul.f32 %v558, 0.2
      %v591 = vmul.f32 %v559, 0.2
      %v592 = vmul.f32 %v560, 0.2
      %v593 = vmul.f32 %v561, 0.2
      %v594 = vmul.f32 %v562, 0.2
      %v595 = vmul.f32 %v563, 0.2
      %v596 = vmul.f32 %v564, 0.2
      %v597 = vmul.f32 %v565, 0.2
      %v598 = vsel %vm566, %v550, %v582
      %v599 = vsel %vm567, %v551, %v583
      %v600 = vsel %vm568, %v552, %v584
      %v601 = vsel %vm569, %v553, %v585
      %v602 = vsel %vm570, %v554, %v586
      %v603 = vsel %vm571, %v555, %v587
      %v604 = vsel %vm572, %v556, %v588
      %v605 = vsel %vm573, %v557, %v589
      %v606 = vsel %vm574, %v558, %v590
      %v607 = vsel %vm575, %v559, %v591
      %v608 = vsel %vm576, %v560, %v592
      %v609 = vsel %vm577, %v561, %v593
      %v610 = vsel %vm578, %v562, %v594
      %v611 = vsel %vm579, %v563, %v595
      %v612 = vsel %vm580, %v564, %v596
      %v613 = vsel %vm581, %v565, %v597
      %v614 = vpack.c.bf16 %v599, %v598
      %v615 = vpack.c.bf16 %v601, %v600
      %v616 = vpack.c.bf16 %v603, %v602
      %v617 = vpack.c.bf16 %v605, %v604
      %v618 = vpack.c.bf16 %v607, %v606
      %v619 = vpack.c.bf16 %v609, %v608
      %v620 = vpack.c.bf16 %v611, %v610
      %v621 = vpack.c.bf16 %v613, %v612
      %v622 = vld [vmem:[%s7] sm:$0xf]
      %v623 = vld [vmem:[%s7 + $0x4] sm:$0xf]
      %v624 = vld [vmem:[%s7 + $0x8] sm:$0xf]
      %v625 = vld [vmem:[%s7 + $0xc] sm:$0xf]
      %v626 = vld [vmem:[%s7 + $0x10] sm:$0xf]
      %v627 = vld [vmem:[%s7 + $0x14] sm:$0xf]
      %v628 = vld [vmem:[%s7 + $0x18] sm:$0xf]
      %v629 = vld [vmem:[%s7 + $0x1c] sm:$0xf]
      %v630 = vld [vmem:[%s7 + $0x20] sm:$0xf]
      %v631 = vld [vmem:[%s7 + $0x24] sm:$0xf]
      %v632 = vld [vmem:[%s7 + $0x28] sm:$0xf]
      %v633 = vld [vmem:[%s7 + $0x2c] sm:$0xf]
      %v634 = vld [vmem:[%s7 + $0x30] sm:$0xf]
      %v635 = vld [vmem:[%s7 + $0x34] sm:$0xf]
      %v636 = vld [vmem:[%s7 + $0x38] sm:$0xf]
      %v637 = vld [vmem:[%s7 + $0x3c] sm:$0xf]
      %v654 = vunpack.c.l.b16 %v622
      %v655 = vunpack.c.l.b16 %v623
      %v656 = vunpack.c.l.b16 %v624
      %v657 = vunpack.c.l.b16 %v625
      %v658 = vunpack.c.l.b16 %v626
      %v659 = vunpack.c.l.b16 %v627
      %v660 = vunpack.c.l.b16 %v628
      %v661 = vunpack.c.l.b16 %v629
      %v662 = vunpack.c.l.b16 %v630
      %v663 = vunpack.c.l.b16 %v631
      %v664 = vunpack.c.l.b16 %v632
      %v665 = vunpack.c.l.b16 %v633
      %v666 = vunpack.c.l.b16 %v634
      %v667 = vunpack.c.l.b16 %v635
      %v668 = vunpack.c.l.b16 %v636
      %v669 = vunpack.c.l.b16 %v637
      %v670 = vpack.c.b16 %v655, %v654
      %v671 = vpack.c.b16 %v657, %v656
      %v672 = vpack.c.b16 %v659, %v658
      %v673 = vpack.c.b16 %v661, %v660
      %v674 = vpack.c.b16 %v663, %v662
      %v675 = vpack.c.b16 %v665, %v664
      %v676 = vpack.c.b16 %v667, %v666
      %v677 = vpack.c.b16 %v669, %v668
      %686 = vmatprep.subr.bf16.mxu0 0
      %687 = vmatpush1.bf16.msra.mxu0 %v677
      %688 = vmatprep.subr.bf16.mxu0 0
      %689 = vmatpush1.bf16.msra.mxu0 %v676
      %690 = vmatprep.subr.bf16.mxu0 0
      %691 = vmatpush1.bf16.msra.mxu0 %v675
      %692 = vmatprep.subr.bf16.mxu0 0
      %693 = vmatpush1.bf16.msra.mxu0 %v674
      %694 = vmatprep.subr.bf16.mxu0 0
      %695 = vmatpush1.bf16.msra.mxu0 %v673
      %696 = vmatprep.subr.bf16.mxu0 0
      %697 = vmatpush1.bf16.msra.mxu0 %v672
      %698 = vmatprep.subr.bf16.mxu0 0
      %699 = vmatpush1.bf16.msra.mxu0 %v671
      %700 = vmatprep.subr.bf16.mxu0 0
      %701 = vmatpush1.bf16.msra.mxu0 %v670
      %702 = vmatprep.subr.bf16.mxu0 0
      %703 = vmatpush2.bf16.msra.mxu0 0
      %704 = vmatprep.subr.bf16.mxu0 0
      %705 = vmatpush2.bf16.msra.mxu0 0
      %706 = vmatprep.subr.bf16.mxu0 0
      %707 = vmatpush2.bf16.msra.mxu0 0
      %708 = vmatprep.subr.bf16.mxu0 0
      %709 = vmatpush2.bf16.msra.mxu0 0
      %710 = vmatprep.subr.bf16.mxu0 0
      %711 = vmatpush2.bf16.msra.mxu0 0
      %712 = vmatprep.subr.bf16.mxu0 0
      %713 = vmatpush2.bf16.msra.mxu0 0
      %714 = vmatprep.subr.bf16.mxu0 0
      %715 = vmatpush2.bf16.msra.mxu0 0
      %716 = vmatprep.subr.bf16.mxu0 0
      %717 = vmatpush2.bf16.msra.mxu0 0
      %718 = vmatprep.mubr.bf16.mxu0 0
      %719 = vmatmul.mubr.bf16.gmra.mxu0 %v614
      %v720 = vpop.f32.mrf.mxu0
      %v721 = vadd.f32 0.0, %v720
      %v722 = vpop.f32.mrf.mxu0
      %v723 = vpop.f32.mrf.mxu0
      %v724 = vadd.f32 0.0, %v723
      %v725 = vpop.f32.mrf.mxu0
      %726 = vmatprep.mubr.bf16.mxu0 0
      %727 = vmatmul.mubr.bf16.gmra.mxu0 %v615
      %v728 = vpop.f32.mrf.mxu0
      %v729 = vadd.f32 0.0, %v728
      %v730 = vpop.f32.mrf.mxu0
      %v731 = vpop.f32.mrf.mxu0
      %v732 = vadd.f32 0.0, %v731
      %v733 = vpop.f32.mrf.mxu0
      %734 = vmatprep.mubr.bf16.mxu0 0
      %735 = vmatmul.mubr.bf16.gmra.mxu0 %v616
      %v736 = vpop.f32.mrf.mxu0
      %v737 = vadd.f32 0.0, %v736
      %v738 = vpop.f32.mrf.mxu0
      %v739 = vpop.f32.mrf.mxu0
      %v740 = vadd.f32 0.0, %v739
      %v741 = vpop.f32.mrf.mxu0
      %742 = vmatprep.mubr.bf16.mxu0 0
      %743 = vmatmul.mubr.bf16.gmra.mxu0 %v617
      %v744 = vpop.f32.mrf.mxu0
      %v745 = vadd.f32 0.0, %v744
      %v746 = vpop.f32.mrf.mxu0
      %v747 = vpop.f32.mrf.mxu0
      %v748 = vadd.f32 0.0, %v747
      %v749 = vpop.f32.mrf.mxu0
      %750 = vmatprep.mubr.bf16.mxu0 0
      %751 = vmatmul.mubr.bf16.gmra.mxu0 %v618
      %v752 = vpop.f32.mrf.mxu0
      %v753 = vadd.f32 0.0, %v752
      %v754 = vpop.f32.mrf.mxu0
      %v755 = vpop.f32.mrf.mxu0
      %v756 = vadd.f32 0.0, %v755
      %v757 = vpop.f32.mrf.mxu0
      %758 = vmatprep.mubr.bf16.mxu0 0
      %759 = vmatmul.mubr.bf16.gmra.mxu0 %v619
      %v760 = vpop.f32.mrf.mxu0
      %v761 = vadd.f32 0.0, %v760
      %v762 = vpop.f32.mrf.mxu0
      %v763 = vpop.f32.mrf.mxu0
      %v764 = vadd.f32 0.0, %v763
      %v765 = vpop.f32.mrf.mxu0
      %766 = vmatprep.mubr.bf16.mxu0 0
      %767 = vmatmul.mubr.bf16.gmra.mxu0 %v620
      %v768 = vpop.f32.mrf.mxu0
      %v769 = vadd.f32 0.0, %v768
      %v770 = vpop.f32.mrf.mxu0
      %v771 = vpop.f32.mrf.mxu0
      %v772 = vadd.f32 0.0, %v771
      %v773 = vpop.f32.mrf.mxu0
      %774 = vmatprep.mubr.bf16.mxu0 0
      %775 = vmatmul.mubr.bf16.gmra.mxu0 %v621
      %v776 = vpop.f32.mrf.mxu0
      %v777 = vadd.f32 0.0, %v776
      %v778 = vpop.f32.mrf.mxu0
      %v779 = vpop.f32.mrf.mxu0
      %v780 = vadd.f32 0.0, %v779
      %v781 = vpop.f32.mrf.mxu0
      %782 = vdwg.mxu0
      %v783 = vld [vmem:[%s320] sm:$0xff]
      %v784 = vld [vmem:[%s320 + $0x8] sm:$0xff]
      %v785 = vld [vmem:[%s320 + $0x10] sm:$0xff]
      %v786 = vld [vmem:[%s320 + $0x18] sm:$0xff]
      %v787 = vld [vmem:[%s320 + $0x20] sm:$0xff]
      %v788 = vld [vmem:[%s320 + $0x28] sm:$0xff]
      %v789 = vld [vmem:[%s320 + $0x30] sm:$0xff]
      %v790 = vld [vmem:[%s320 + $0x38] sm:$0xff]
      %v791 = vld [vmem:[%s320 + $0x40] sm:$0xff]
      %v792 = vld [vmem:[%s320 + $0x48] sm:$0xff]
      %v793 = vld [vmem:[%s320 + $0x50] sm:$0xff]
      %v794 = vld [vmem:[%s320 + $0x58] sm:$0xff]
      %v795 = vld [vmem:[%s320 + $0x60] sm:$0xff]
      %v796 = vld [vmem:[%s320 + $0x68] sm:$0xff]
      %v797 = vld [vmem:[%s320 + $0x70] sm:$0xff]
      %v798 = vld [vmem:[%s320 + $0x78] sm:$0xff]
      %vm799 = vcmp.gt.f32.partialorder %v783, 0.0
      %vm800 = vcmp.gt.f32.partialorder %v784, 0.0
      %vm801 = vcmp.gt.f32.partialorder %v785, 0.0
      %vm802 = vcmp.gt.f32.partialorder %v786, 0.0
      %vm803 = vcmp.gt.f32.partialorder %v787, 0.0
      %vm804 = vcmp.gt.f32.partialorder %v788, 0.0
      %vm805 = vcmp.gt.f32.partialorder %v789, 0.0
      %vm806 = vcmp.gt.f32.partialorder %v790, 0.0
      %vm807 = vcmp.gt.f32.partialorder %v791, 0.0
      %vm808 = vcmp.gt.f32.partialorder %v792, 0.0
      %vm809 = vcmp.gt.f32.partialorder %v793, 0.0
      %vm810 = vcmp.gt.f32.partialorder %v794, 0.0
      %vm811 = vcmp.gt.f32.partialorder %v795, 0.0
      %vm812 = vcmp.gt.f32.partialorder %v796, 0.0
      %vm813 = vcmp.gt.f32.partialorder %v797, 0.0
      %vm814 = vcmp.gt.f32.partialorder %v798, 0.0
      %v815 = vsel %vm799, 1, 0
      %v816 = vsel %vm800, 1, 0
      %v817 = vsel %vm801, 1, 0
      %v818 = vsel %vm802, 1, 0
      %v819 = vsel %vm803, 1, 0
      %v820 = vsel %vm804, 1, 0
      %v821 = vsel %vm805, 1, 0
      %v822 = vsel %vm806, 1, 0
      %v823 = vsel %vm807, 1, 0
      %v824 = vsel %vm808, 1, 0
      %v825 = vsel %vm809, 1, 0
      %v826 = vsel %vm810, 1, 0
      %v827 = vsel %vm811, 1, 0
      %v828 = vsel %vm812, 1, 0
      %v829 = vsel %vm813, 1, 0
      %v830 = vsel %vm814, 1, 0
      %831 = vset.pattern.permute.xlu0 0
      %832 = vperm.xlu0 %831, %v815
      %v833 = vpop.permute.xlu0 %832
      %834 = vset.pattern.permute.xlu0 0
      %835 = vperm.xlu0 %834, %v816
      %v836 = vpop.permute.xlu0 %835
      %837 = vset.pattern.permute.xlu0 0
      %838 = vperm.xlu0 %837, %v817
      %v839 = vpop.permute.xlu0 %838
      %840 = vset.pattern.permute.xlu0 0
      %841 = vperm.xlu0 %840, %v818
      %v842 = vpop.permute.xlu0 %841
      %843 = vset.pattern.permute.xlu0 0
      %844 = vperm.xlu0 %843, %v819
      %v845 = vpop.permute.xlu0 %844
      %846 = vset.pattern.permute.xlu0 0
      %847 = vperm.xlu0 %846, %v820
      %v848 = vpop.permute.xlu0 %847
      %849 = vset.pattern.permute.xlu0 0
      %850 = vperm.xlu0 %849, %v821
      %v851 = vpop.permute.xlu0 %850
      %852 = vset.pattern.permute.xlu0 0
      %853 = vperm.xlu0 %852, %v822
      %v854 = vpop.permute.xlu0 %853
      %855 = vset.pattern.permute.xlu0 0
      %856 = vperm.xlu0 %855, %v823
      %v857 = vpop.permute.xlu0 %856
      %858 = vset.pattern.permute.xlu0 0
      %859 = vperm.xlu0 %858, %v824
      %v860 = vpop.permute.xlu0 %859
      %861 = vset.pattern.permute.xlu0 0
      %862 = vperm.xlu0 %861, %v825
      %v863 = vpop.permute.xlu0 %862
      %864 = vset.pattern.permute.xlu0 0
      %865 = vperm.xlu0 %864, %v826
      %v866 = vpop.permute.xlu0 %865
      %867 = vset.pattern.permute.xlu0 0
      %868 = vperm.xlu0 %867, %v827
      %v869 = vpop.permute.xlu0 %868
      %870 = vset.pattern.permute.xlu0 0
      %871 = vperm.xlu0 %870, %v828
      %v872 = vpop.permute.xlu0 %871
      %873 = vset.pattern.permute.xlu0 0
      %874 = vperm.xlu0 %873, %v829
      %v875 = vpop.permute.xlu0 %874
      %876 = vset.pattern.permute.xlu0 0
      %877 = vperm.xlu0 %876, %v830
      %v878 = vpop.permute.xlu0 %877
      %vm879 = vcmp.eq.s32.totalorder %v833, 1
      %vm880 = vcmp.eq.s32.totalorder %v836, 1
      %vm881 = vcmp.eq.s32.totalorder %v839, 1
      %vm882 = vcmp.eq.s32.totalorder %v842, 1
      %vm883 = vcmp.eq.s32.totalorder %v845, 1
      %vm884 = vcmp.eq.s32.totalorder %v848, 1
      %vm885 = vcmp.eq.s32.totalorder %v851, 1
      %vm886 = vcmp.eq.s32.totalorder %v854, 1
      %vm887 = vcmp.eq.s32.totalorder %v857, 1
      %vm888 = vcmp.eq.s32.totalorder %v860, 1
      %vm889 = vcmp.eq.s32.totalorder %v863, 1
      %vm890 = vcmp.eq.s32.totalorder %v866, 1
      %vm891 = vcmp.eq.s32.totalorder %v869, 1
      %vm892 = vcmp.eq.s32.totalorder %v872, 1
      %vm893 = vcmp.eq.s32.totalorder %v875, 1
      %vm894 = vcmp.eq.s32.totalorder %v878, 1
      %v895 = vsel %vm879, %v721, -1e+30
      %v896 = vsel %vm880, %v724, -1e+30
      %v897 = vsel %vm881, %v729, -1e+30
      %v898 = vsel %vm882, %v732, -1e+30
      %v899 = vsel %vm883, %v737, -1e+30
      %v900 = vsel %vm884, %v740, -1e+30
      %v901 = vsel %vm885, %v745, -1e+30
      %v902 = vsel %vm886, %v748, -1e+30
      %v903 = vsel %vm887, %v753, -1e+30
      %v904 = vsel %vm888, %v756, -1e+30
      %v905 = vsel %vm889, %v761, -1e+30
      %v906 = vsel %vm890, %v764, -1e+30
      %v907 = vsel %vm891, %v769, -1e+30
      %v908 = vsel %vm892, %v772, -1e+30
      %v909 = vsel %vm893, %v777, -1e+30
      %v910 = vsel %vm894, %v780, -1e+30
      %v911 = vmax.f32 %v895, %v896
      %v912 = vrot.slane %v911, 4
      %v913 = vmax.f32 %v911, %v912
      %v914 = vrot.slane %v913, 2
      %v915 = vmax.f32 %v913, %v914
      %v916 = vrot.slane %v915, 1
      %v917 = vmax.f32 %v915, %v916
      %v918 = vmax.f32 %v897, %v898
      %v919 = vrot.slane %v918, 4
      %v920 = vmax.f32 %v918, %v919
      %v921 = vrot.slane %v920, 2
      %v922 = vmax.f32 %v920, %v921
      %v923 = vrot.slane %v922, 1
      %v924 = vmax.f32 %v922, %v923
      %v925 = vmax.f32 %v899, %v900
      %v926 = vrot.slane %v925, 4
      %v927 = vmax.f32 %v925, %v926
      %v928 = vrot.slane %v927, 2
      %v929 = vmax.f32 %v927, %v928
      %v930 = vrot.slane %v929, 1
      %v931 = vmax.f32 %v929, %v930
      %v932 = vmax.f32 %v901, %v902
      %v933 = vrot.slane %v932, 4
      %v934 = vmax.f32 %v932, %v933
      %v935 = vrot.slane %v934, 2
      %v936 = vmax.f32 %v934, %v935
      %v937 = vrot.slane %v936, 1
      %v938 = vmax.f32 %v936, %v937
      %v939 = vmax.f32 %v903, %v904
      %v940 = vrot.slane %v939, 4
      %v941 = vmax.f32 %v939, %v940
      %v942 = vrot.slane %v941, 2
      %v943 = vmax.f32 %v941, %v942
      %v944 = vrot.slane %v943, 1
      %v945 = vmax.f32 %v943, %v944
      %v946 = vmax.f32 %v905, %v906
      %v947 = vrot.slane %v946, 4
      %v948 = vmax.f32 %v946, %v947
      %v949 = vrot.slane %v948, 2
      %v950 = vmax.f32 %v948, %v949
      %v951 = vrot.slane %v950, 1
      %v952 = vmax.f32 %v950, %v951
      %v953 = vmax.f32 %v907, %v908
      %v954 = vrot.slane %v953, 4
      %v955 = vmax.f32 %v953, %v954
      %v956 = vrot.slane %v955, 2
      %v957 = vmax.f32 %v955, %v956
      %v958 = vrot.slane %v957, 1
      %v959 = vmax.f32 %v957, %v958
      %v960 = vmax.f32 %v909, %v910
      %v961 = vrot.slane %v960, 4
      %v962 = vmax.f32 %v960, %v961
      %v963 = vrot.slane %v962, 2
      %v964 = vmax.f32 %v962, %v963
      %v965 = vrot.slane %v964, 1
      %v966 = vmax.f32 %v964, %v965
      %v967 = vsub.f32 %v721, %v917
      %v968 = vsub.f32 %v724, %v917
      %v969 = vsub.f32 %v729, %v924
      %v970 = vsub.f32 %v732, %v924
      %v971 = vsub.f32 %v737, %v931
      %v972 = vsub.f32 %v740, %v931
      %v973 = vsub.f32 %v745, %v938
      %v974 = vsub.f32 %v748, %v938
      %v975 = vsub.f32 %v753, %v945
      %v976 = vsub.f32 %v756, %v945
      %v977 = vsub.f32 %v761, %v952
      %v978 = vsub.f32 %v764, %v952
      %v979 = vsub.f32 %v769, %v959
      %v980 = vsub.f32 %v772, %v959
      %v981 = vsub.f32 %v777, %v966
      %v982 = vsub.f32 %v780, %v966
      %v983 = vmul.f32 %v967, 1.442695
      %v984 = vpow.pop %v983
      %v985 = vmul.f32 %v968, 1.442695
      %v986 = vpow.pop %v985
      %v987 = vmul.f32 %v969, 1.442695
      %v988 = vpow.pop %v987
      %v989 = vmul.f32 %v970, 1.442695
      %v990 = vpow.pop %v989
      %v991 = vmul.f32 %v971, 1.442695
      %v992 = vpow.pop %v991
      %v993 = vmul.f32 %v972, 1.442695
      %v994 = vpow.pop %v993
      %v995 = vmul.f32 %v973, 1.442695
      %v996 = vpow.pop %v995
      %v997 = vmul.f32 %v974, 1.442695
      %v998 = vpow.pop %v997
      %v999 = vmul.f32 %v975, 1.442695
      %v1000 = vpow.pop %v999
      %v1001 = vmul.f32 %v976, 1.442695
      %v1002 = vpow.pop %v1001
      %v1003 = vmul.f32 %v977, 1.442695
      %v1004 = vpow.pop %v1003
      %v1005 = vmul.f32 %v978, 1.442695
      %v1006 = vpow.pop %v1005
      %v1007 = vmul.f32 %v979, 1.442695
      %v1008 = vpow.pop %v1007
      %v1009 = vmul.f32 %v980, 1.442695
      %v1010 = vpow.pop %v1009
      %v1011 = vmul.f32 %v981, 1.442695
      %v1012 = vpow.pop %v1011
      %v1013 = vmul.f32 %v982, 1.442695
      %v1014 = vpow.pop %v1013
      %v1015 = vsel %vm879, %v984, 0.0
      %v1016 = vsel %vm880, %v986, 0.0
      %v1017 = vsel %vm881, %v988, 0.0
      %v1018 = vsel %vm882, %v990, 0.0
      %v1019 = vsel %vm883, %v992, 0.0
      %v1020 = vsel %vm884, %v994, 0.0
      %v1021 = vsel %vm885, %v996, 0.0
      %v1022 = vsel %vm886, %v998, 0.0
      %v1023 = vsel %vm887, %v1000, 0.0
      %v1024 = vsel %vm888, %v1002, 0.0
      %v1025 = vsel %vm889, %v1004, 0.0
      %v1026 = vsel %vm890, %v1006, 0.0
      %v1027 = vsel %vm891, %v1008, 0.0
      %v1028 = vsel %vm892, %v1010, 0.0
      %v1029 = vsel %vm893, %v1012, 0.0
      %v1030 = vsel %vm894, %v1014, 0.0
      %v1031 = vmul.f32 %v1015, %v384
      %v1032 = vmul.f32 %v1016, %v387
      %v1033 = vmul.f32 %v1017, %v384
      %v1034 = vmul.f32 %v1018, %v387
      %v1035 = vmul.f32 %v1019, %v384
      %v1036 = vmul.f32 %v1020, %v387
      %v1037 = vmul.f32 %v1021, %v384
      %v1038 = vmul.f32 %v1022, %v387
      %v1039 = vmul.f32 %v1023, %v384
      %v1040 = vmul.f32 %v1024, %v387
      %v1041 = vmul.f32 %v1025, %v384
      %v1042 = vmul.f32 %v1026, %v387
      %v1043 = vmul.f32 %v1027, %v384
      %v1044 = vmul.f32 %v1028, %v387
      %v1045 = vmul.f32 %v1029, %v384
      %v1046 = vmul.f32 %v1030, %v387
      %v1047 = vadd.f32 %v1031, %v1032
      %v1048 = vrot.slane %v1047, 4
      %v1049 = vadd.f32 %v1047, %v1048
      %v1050 = vrot.slane %v1049, 2
      %v1051 = vadd.f32 %v1049, %v1050
      %v1052 = vrot.slane %v1051, 1
      %v1053 = vadd.f32 %v1051, %v1052
      %v1054 = vadd.f32 %v1033, %v1034
      %v1055 = vrot.slane %v1054, 4
      %v1056 = vadd.f32 %v1054, %v1055
      %v1057 = vrot.slane %v1056, 2
      %v1058 = vadd.f32 %v1056, %v1057
      %v1059 = vrot.slane %v1058, 1
      %v1060 = vadd.f32 %v1058, %v1059
      %v1061 = vadd.f32 %v1035, %v1036
      %v1062 = vrot.slane %v1061, 4
      %v1063 = vadd.f32 %v1061, %v1062
      %v1064 = vrot.slane %v1063, 2
      %v1065 = vadd.f32 %v1063, %v1064
      %v1066 = vrot.slane %v1065, 1
      %v1067 = vadd.f32 %v1065, %v1066
      %v1068 = vadd.f32 %v1037, %v1038
      %v1069 = vrot.slane %v1068, 4
      %v1070 = vadd.f32 %v1068, %v1069
      %v1071 = vrot.slane %v1070, 2
      %v1072 = vadd.f32 %v1070, %v1071
      %v1073 = vrot.slane %v1072, 1
      %v1074 = vadd.f32 %v1072, %v1073
      %v1075 = vadd.f32 %v1039, %v1040
      %v1076 = vrot.slane %v1075, 4
      %v1077 = vadd.f32 %v1075, %v1076
      %v1078 = vrot.slane %v1077, 2
      %v1079 = vadd.f32 %v1077, %v1078
      %v1080 = vrot.slane %v1079, 1
      %v1081 = vadd.f32 %v1079, %v1080
      %v1082 = vadd.f32 %v1041, %v1042
      %v1083 = vrot.slane %v1082, 4
      %v1084 = vadd.f32 %v1082, %v1083
      %v1085 = vrot.slane %v1084, 2
      %v1086 = vadd.f32 %v1084, %v1085
      %v1087 = vrot.slane %v1086, 1
      %v1088 = vadd.f32 %v1086, %v1087
      %v1089 = vadd.f32 %v1043, %v1044
      %v1090 = vrot.slane %v1089, 4
      %v1091 = vadd.f32 %v1089, %v1090
      %v1092 = vrot.slane %v1091, 2
      %v1093 = vadd.f32 %v1091, %v1092
      %v1094 = vrot.slane %v1093, 1
      %v1095 = vadd.f32 %v1093, %v1094
      %v1096 = vadd.f32 %v1045, %v1046
      %v1097 = vrot.slane %v1096, 4
      %v1098 = vadd.f32 %v1096, %v1097
      %v1099 = vrot.slane %v1098, 2
      %v1100 = vadd.f32 %v1098, %v1099
      %v1101 = vrot.slane %v1100, 1
      %v1102 = vadd.f32 %v1100, %v1101
      %v1103 = vadd.f32 %v1015, %v1016
      %v1104 = vrot.slane %v1103, 4
      %v1105 = vadd.f32 %v1103, %v1104
      %v1106 = vrot.slane %v1105, 2
      %v1107 = vadd.f32 %v1105, %v1106
      %v1108 = vrot.slane %v1107, 1
      %v1109 = vadd.f32 %v1107, %v1108
      %v1110 = vadd.f32 %v1017, %v1018
      %v1111 = vrot.slane %v1110, 4
      %v1112 = vadd.f32 %v1110, %v1111
      %v1113 = vrot.slane %v1112, 2
      %v1114 = vadd.f32 %v1112, %v1113
      %v1115 = vrot.slane %v1114, 1
      %v1116 = vadd.f32 %v1114, %v1115
      %v1117 = vadd.f32 %v1019, %v1020
      %v1118 = vrot.slane %v1117, 4
      %v1119 = vadd.f32 %v1117, %v1118
      %v1120 = vrot.slane %v1119, 2
      %v1121 = vadd.f32 %v1119, %v1120
      %v1122 = vrot.slane %v1121, 1
      %v1123 = vadd.f32 %v1121, %v1122
      %v1124 = vadd.f32 %v1021, %v1022
      %v1125 = vrot.slane %v1124, 4
      %v1126 = vadd.f32 %v1124, %v1125
      %v1127 = vrot.slane %v1126, 2
      %v1128 = vadd.f32 %v1126, %v1127
      %v1129 = vrot.slane %v1128, 1
      %v1130 = vadd.f32 %v1128, %v1129
      %v1131 = vadd.f32 %v1023, %v1024
      %v1132 = vrot.slane %v1131, 4
      %v1133 = vadd.f32 %v1131, %v1132
      %v1134 = vrot.slane %v1133, 2
      %v1135 = vadd.f32 %v1133, %v1134
      %v1136 = vrot.slane %v1135, 1
      %v1137 = vadd.f32 %v1135, %v1136
      %v1138 = vadd.f32 %v1025, %v1026
      %v1139 = vrot.slane %v1138, 4
      %v1140 = vadd.f32 %v1138, %v1139
      %v1141 = vrot.slane %v1140, 2
      %v1142 = vadd.f32 %v1140, %v1141
      %v1143 = vrot.slane %v1142, 1
      %v1144 = vadd.f32 %v1142, %v1143
      %v1145 = vadd.f32 %v1027, %v1028
      %v1146 = vrot.slane %v1145, 4
      %v1147 = vadd.f32 %v1145, %v1146
      %v1148 = vrot.slane %v1147, 2
      %v1149 = vadd.f32 %v1147, %v1148
      %v1150 = vrot.slane %v1149, 1
      %v1151 = vadd.f32 %v1149, %v1150
      %v1152 = vadd.f32 %v1029, %v1030
      %v1153 = vrot.slane %v1152, 4
      %v1154 = vadd.f32 %v1152, %v1153
      %v1155 = vrot.slane %v1154, 2
      %v1156 = vadd.f32 %v1154, %v1155
      %v1157 = vrot.slane %v1156, 1
      %v1158 = vadd.f32 %v1156, %v1157
      %v1159 = vmax.f32 %v1109, 1e-20
      %v1160 = vmax.f32 %v1116, 1e-20
      %v1161 = vmax.f32 %v1123, 1e-20
      %v1162 = vmax.f32 %v1130, 1e-20
      %v1163 = vmax.f32 %v1137, 1e-20
      %v1164 = vmax.f32 %v1144, 1e-20
      %v1165 = vmax.f32 %v1151, 1e-20
      %v1166 = vmax.f32 %v1158, 1e-20
      %v1167 = vrcp.pop %v1159
      %v1168 = vrcp.pop %v1160
      %v1169 = vrcp.pop %v1161
      %v1170 = vrcp.pop %v1162
      %v1171 = vrcp.pop %v1163
      %v1172 = vrcp.pop %v1164
      %v1173 = vrcp.pop %v1165
      %v1174 = vrcp.pop %v1166
      %v1175 = vmul.f32 %v1053, %v1167
      %v1176 = vmul.f32 %v1060, %v1168
      %v1177 = vmul.f32 %v1067, %v1169
      %v1178 = vmul.f32 %v1074, %v1170
      %v1179 = vmul.f32 %v1081, %v1171
      %v1180 = vmul.f32 %v1088, %v1172
      %v1181 = vmul.f32 %v1095, %v1173
      %v1182 = vmul.f32 %v1102, %v1174
      %v1184 = vrot.slane %v456, 1
      %v1185 = vrot.slane %v456, 2
      %v1186 = vrot.slane %v456, 3
      %v1187 = vrot.slane %v456, 4
      %v1188 = vrot.slane %v456, 5
      %v1189 = vrot.slane %v456, 6
      %v1190 = vrot.slane %v456, 7
      %v1199 = vadd.f32 %v1175, %v456
      %v1200 = vadd.f32 %v1176, %v1184
      %v1201 = vadd.f32 %v1177, %v1185
      %v1202 = vadd.f32 %v1178, %v1186
      %v1203 = vadd.f32 %v1179, %v1187
      %v1204 = vadd.f32 %v1180, %v1188
      %v1205 = vadd.f32 %v1181, %v1189
      %v1206 = vadd.f32 %v1182, %v1190
      %v1207 = vmax.f32 %v1199, 0.0
      %v1208 = vmax.f32 %v1200, 0.0
      %v1209 = vmax.f32 %v1201, 0.0
      %v1210 = vmax.f32 %v1202, 0.0
      %v1211 = vmax.f32 %v1203, 0.0
      %v1212 = vmax.f32 %v1204, 0.0
      %v1213 = vmax.f32 %v1205, 0.0
      %v1214 = vmax.f32 %v1206, 0.0
      %v1223 = vrot.slane %v1208, 7
      %vm1224 = vcmask 1041409
      %v1225 = vsel %vm1224, %v1223, %v1207
      %v1226 = vrot.slane %v1209, 6
      %vm1227 = vcmask 1042434
      %v1228 = vsel %vm1227, %v1226, %v1225
      %v1229 = vrot.slane %v1210, 5
      %vm1230 = vcmask 1043459
      %v1231 = vsel %vm1230, %v1229, %v1228
      %v1232 = vrot.slane %v1211, 4
      %vm1233 = vcmask 1044484
      %v1234 = vsel %vm1233, %v1232, %v1231
      %v1235 = vrot.slane %v1212, 3
      %vm1236 = vcmask 1045509
      %v1237 = vsel %vm1236, %v1235, %v1234
      %v1238 = vrot.slane %v1213, 2
      %vm1239 = vcmask 1046534
      %v1240 = vsel %vm1239, %v1238, %v1237
      %v1241 = vrot.slane %v1214, 1
      %vm1242 = vcmask 1047559
      %v1243 = vsel %vm1242, %v1241, %v1240
      %1245 = vst [vmem:[%s325] sm:$0xff] %v1243
      %p1246 = scmp.lt.s32.totalorder %s19, 1
      %s1247 = scalar_select %p1246, %s19, 1
      %s1248 = smul.addr %s1247, 8
      %s1249 = scalar_lea.vmem %s8, %s1248
      // Predicated region
      $region53: #{unit_gat4_forward.2} parent=51 // pred_check
        %p1250 = pneg %p215
      $region54: #{unit_gat4_forward.2} parent=51 // pred_check_branch
        %1252 = sbr.rel (%p1250) target = $region56
      $region55: #{unit_gat4_forward.2} parent=51 // pred_region
        _
      $region56: #{unit_gat4_forward.2} parent=51 // pred_fallthru
        _
    $region52: #{unit_gat4_forward.2} parent=5 // pred_fallthru
      _
    %p1253 = scmp.le.s32.totalorder 2, %s14
    // Predicated region
    $region57: #{unit_gat4_forward.2} parent=5 // pred_check
      %p1254 = pneg %p1253
    $region58: #{unit_gat4_forward.2} parent=5 // pred_check_branch
      %1256 = sbr.rel (%p1254) target = $region60
    $region59: #{unit_gat4_forward.2} parent=5 // pred_region
      %s1257 = ssub.s32 %s14, 2
      // Predicated region
      $region61: #{unit_gat4_forward.2} parent=59 // pred_check
        %p1258 = pneg %p221
      $region62: #{unit_gat4_forward.2} parent=59 // pred_check_branch
        %1260 = sbr.rel (%p1258) target = $region64
      $region63: #{unit_gat4_forward.2} parent=59 // pred_region
        %p1261 = scmp.lt.s32.totalorder %s20, 1
        %s1262 = scalar_select %p1261, %s20, 1
        %s1263 = smul.addr %s1262, 8
        %s1264 = scalar_lea.vmem %s8, %s1263
      $region64: #{unit_gat4_forward.2} parent=59 // pred_fallthru
        _
    $region60: #{unit_gat4_forward.2} parent=5 // pred_fallthru
      _
  $region6: #{unit_gat4_forward.2} parent=0 // loop_footer
    %s18 = sadd.s32 1, %s14
  $region7: #{unit_gat4_forward.2} parent=0 // loop_footer_branch
    %13 = sbr.rel target = $region3
  $region8: #{unit_gat4_forward.2} parent=0 // loop_exit
    _

// kernel: unit_gat4_forward.3
$region0: #{unit_gat4_forward.3}
  #allocation0 [shape = 'u32[]', space=smem, size = 0x4, offset = 0x4, fixed_abs, tag = 'smem constant byte address 0x4 - core index']
  #allocation1 [shape = 'u32[144,128]{1,0:T(1,128)}', space=vmem, size = 0x12000, scoped, tag = 'internal scratch']
  %s0 = inlined_call_operand.vmem [shape: f32[16,128], index: 0, kind: input, shape index: {}, may-alias: {0,1}]
  %s1 = inlined_call_operand.vmem [shape: f32[16,128], index: 1, kind: input, shape index: {}, may-alias: {0,1}]
  %s2 = inlined_call_operand.vmem [shape: f32[16,16,1], index: 2, kind: input, shape index: {}]
  %s3 = inlined_call_operand.vmem [shape: bf16[128,128], index: 3, kind: input, shape index: {}]
  %s4 = inlined_call_operand.vmem [shape: f32[1,128], index: 4, kind: input, shape index: {}]
  %s5 = inlined_call_operand.vmem [shape: bf16[128,256], index: 5, kind: input, shape index: {}]
  %s6 = inlined_call_operand.vmem [shape: f32[1,256], index: 6, kind: input, shape index: {}]
  %s7 = inlined_call_operand.vmem [shape: bf16[128,128], index: 7, kind: input, shape index: {}]
  %s8 = inlined_call_operand.hbm [shape: f32[16,128], index: 8, kind: output, shape index: {}]
  %s9 = sld [smem:[#allocation0]]
  $region65: #{unit_gat4_forward.3} parent=0
    _
  %s11 = ssub.s32 1, %s9
  %s12 = scalar_select 0, %s11, %s9
  $region1: #{unit_gat4_forward.3} parent=0
    #allocation2 [shape = 'u8[8192]{0}', space=vmem, size = 0x2000, scoped, tag = 'output window, operand 0']
    #allocation3 [shape = 's32[2]{0}', space=sflag, size = 0x8, scoped, tag = 'scoped memory for unit_gat4_forward.3']
    %13 = vsyncpa [#allocation3], 0
    %s14 = scalar_lea.sflag [#allocation3], 1
    %15 = vsyncpa %s14, 0
    loop: start=0, step=1, limit=4
    $region2: #{unit_gat4_forward.3} parent=1 // loop_pre_header
      _
    $region3: #{unit_gat4_forward.3} parent=1 // loop_header
      %s17 = sphi 0, %s21
      %p18 = scmp.ge.s32.totalorder %s17, 4
      %s25 = sphi 0, %s25
      %s27 = sphi 0, %s25
      %s28 = sphi 0, %s27
      %s42 = sphi 0, %s28
      %s48 = sphi 0, %s50
      %s51 = sphi 0, %s48
      %s52 = sphi 0, %s51
      %s68 = sphi 0, %s52
      %s74 = sphi 0, %s76
      %s77 = sphi 0, %s74
      %s78 = sphi 0, %s77
      %s94 = sphi 0, %s78
      %s98 = sphi 0, %s98
      %s100 = sphi 0, %s98
      %s101 = sphi 0, %s100
      %s115 = sphi 0, %s101
      %s119 = sphi 0, %s119
      %s121 = sphi 0, %s119
      %s122 = sphi 0, %s121
      %s136 = sphi 0, %s122
      %s140 = sphi 0, %s140
      %s142 = sphi 0, %s140
      %s143 = sphi 0, %s142
      %s157 = sphi 0, %s143
      %s161 = sphi 0, %s161
      %s163 = sphi 0, %s161
      %s164 = sphi 0, %s163
      %s178 = sphi 0, %s164
      %s182 = sphi 0, %s182
      %s184 = sphi 0, %s182
      %s185 = sphi 0, %s184
      %s199 = sphi 0, %s185
      %s205 = sphi 0, %s207
      %s208 = sphi 0, %s205
      %s209 = sphi 0, %s208
      %s225 = sphi 0, %s209
    $region4: #{unit_gat4_forward.3} parent=1 // loop_header_branch
      %20 = sbr.rel (%p18) target = $region8
    $region5: #{unit_gat4_forward.3} parent=1 // loop_body
      %s22 = ssub.s32 %s17, 1
      %s23 = ssub.s32 %s17, 2
      %s24 = sadd.s32 %s17, 1
      %s26 = sadd.s32 %s25, 1
      %p29 = scmp.eq.s32.totalorder %s17, 1
      %p30 = scmp.ne.s32.totalorder %s25, %s27
      %p31 = scmp.eq.s32.totalorder %s17, 0
      %p32 = por %p30, %p31
      %p33 = scmp.ne.s32.totalorder %s25, %s27
      %p34 = scmp.eq.s32.totalorder %s22, 1
      %p35 = por %p33, %p34
      %p36 = scmp.ne.s32.totalorder %s27, %s28
      %p37 = scmp.eq.s32.totalorder %s22, 0
      %p38 = por %p36, %p37
      %p39 = scmp.ne.s32.totalorder %s27, %s28
      %p40 = scmp.eq.s32.totalorder %s23, 1
      %p41 = por %p39, %p40
      %p43 = scmp.ne.s32.totalorder %s28, %s42
      %p44 = scmp.eq.s32.totalorder %s23, 0
      %p45 = por %p43, %p44
      %s46 = ssub.s32 %s17, %s24
      %p47 = scmp.eq.s32.totalorder %s46, 0
      %s49 = sadd.s32 %s48, 1
      %s50 = scalar_select %p47, %s48, %s49
      %p53 = pneg %p47
      %p54 = scmp.eq.s32.totalorder %s17, 1
      %p55 = por %p53, %p54
      %p56 = scmp.ne.s32.totalorder %s48, %s51
      %p57 = scmp.eq.s32.totalorder %s17, 0
      %p58 = por %p56, %p57
      %p59 = scmp.ne.s32.totalorder %s48, %s51
      %p60 = scmp.eq.s32.totalorder %s22, 1
      %p61 = por %p59, %p60
      %p62 = scmp.ne.s32.totalorder %s51, %s52
      %p63 = scmp.eq.s32.totalorder %s22, 0
      %p64 = por %p62, %p63
      %p65 = scmp.ne.s32.totalorder %s51, %s52
      %p66 = scmp.eq.s32.totalorder %s23, 1
      %p67 = por %p65, %p66
      %p69 = scmp.ne.s32.totalorder %s52, %s68
      %p70 = scmp.eq.s32.totalorder %s23, 0
      %p71 = por %p69, %p70
      %s72 = ssub.s32 %s17, %s24
      %p73 = scmp.eq.s32.totalorder %s72, 0
      %s75 = sadd.s32 %s74, 1
      %s76 = scalar_select %p73, %s74, %s75
      %p79 = pneg %p73
      %p80 = scmp.eq.s32.totalorder %s17, 1
      %p81 = por %p79, %p80
      %p82 = scmp.ne.s32.totalorder %s74, %s77
      %p83 = scmp.eq.s32.totalorder %s17, 0
      %p84 = por %p82, %p83
      %p85 = scmp.ne.s32.totalorder %s74, %s77
      %p86 = scmp.eq.s32.totalorder %s22, 1
      %p87 = por %p85, %p86
      %p88 = scmp.ne.s32.totalorder %s77, %s78
      %p89 = scmp.eq.s32.totalorder %s22, 0
      %p90 = por %p88, %p89
      %p91 = scmp.ne.s32.totalorder %s77, %s78
      %p92 = scmp.eq.s32.totalorder %s23, 1
      %p93 = por %p91, %p92
      %p95 = scmp.ne.s32.totalorder %s78, %s94
      %p96 = scmp.eq.s32.totalorder %s23, 0
      %p97 = por %p95, %p96
      %s99 = sadd.s32 %s98, 1
      %p102 = scmp.eq.s32.totalorder %s17, 1
      %p103 = scmp.ne.s32.totalorder %s98, %s100
      %p104 = scmp.eq.s32.totalorder %s17, 0
      %p105 = por %p103, %p104
      %p106 = scmp.ne.s32.totalorder %s98, %s100
      %p107 = scmp.eq.s32.totalorder %s22, 1
      %p108 = por %p106, %p107
      %p109 = scmp.ne.s32.totalorder %s100, %s101
      %p110 = scmp.eq.s32.totalorder %s22, 0
      %p111 = por %p109, %p110
      %p112 = scmp.ne.s32.totalorder %s100, %s101
      %p113 = scmp.eq.s32.totalorder %s23, 1
      %p114 = por %p112, %p113
      %p116 = scmp.ne.s32.totalorder %s101, %s115
      %p117 = scmp.eq.s32.totalorder %s23, 0
      %p118 = por %p116, %p117
      %s120 = sadd.s32 %s119, 1
      %p123 = scmp.eq.s32.totalorder %s17, 1
      %p124 = scmp.ne.s32.totalorder %s119, %s121
      %p125 = scmp.eq.s32.totalorder %s17, 0
      %p126 = por %p124, %p125
      %p127 = scmp.ne.s32.totalorder %s119, %s121
      %p128 = scmp.eq.s32.totalorder %s22, 1
      %p129 = por %p127, %p128
      %p130 = scmp.ne.s32.totalorder %s121, %s122
      %p131 = scmp.eq.s32.totalorder %s22, 0
      %p132 = por %p130, %p131
      %p133 = scmp.ne.s32.totalorder %s121, %s122
      %p134 = scmp.eq.s32.totalorder %s23, 1
      %p135 = por %p133, %p134
      %p137 = scmp.ne.s32.totalorder %s122, %s136
      %p138 = scmp.eq.s32.totalorder %s23, 0
      %p139 = por %p137, %p138
      %s141 = sadd.s32 %s140, 1
      %p144 = scmp.eq.s32.totalorder %s17, 1
      %p145 = scmp.ne.s32.totalorder %s140, %s142
      %p146 = scmp.eq.s32.totalorder %s17, 0
      %p147 = por %p145, %p146
      %p148 = scmp.ne.s32.totalorder %s140, %s142
      %p149 = scmp.eq.s32.totalorder %s22, 1
      %p150 = por %p148, %p149
      %p151 = scmp.ne.s32.totalorder %s142, %s143
      %p152 = scmp.eq.s32.totalorder %s22, 0
      %p153 = por %p151, %p152
      %p154 = scmp.ne.s32.totalorder %s142, %s143
      %p155 = scmp.eq.s32.totalorder %s23, 1
      %p156 = por %p154, %p155
      %p158 = scmp.ne.s32.totalorder %s143, %s157
      %p159 = scmp.eq.s32.totalorder %s23, 0
      %p160 = por %p158, %p159
      %s162 = sadd.s32 %s161, 1
      %p165 = scmp.eq.s32.totalorder %s17, 1
      %p166 = scmp.ne.s32.totalorder %s161, %s163
      %p167 = scmp.eq.s32.totalorder %s17, 0
      %p168 = por %p166, %p167
      %p169 = scmp.ne.s32.totalorder %s161, %s163
      %p170 = scmp.eq.s32.totalorder %s22, 1
      %p171 = por %p169, %p170
      %p172 = scmp.ne.s32.totalorder %s163, %s164
      %p173 = scmp.eq.s32.totalorder %s22, 0
      %p174 = por %p172, %p173
      %p175 = scmp.ne.s32.totalorder %s163, %s164
      %p176 = scmp.eq.s32.totalorder %s23, 1
      %p177 = por %p175, %p176
      %p179 = scmp.ne.s32.totalorder %s164, %s178
      %p180 = scmp.eq.s32.totalorder %s23, 0
      %p181 = por %p179, %p180
      %s183 = sadd.s32 %s182, 1
      %p186 = scmp.eq.s32.totalorder %s17, 1
      %p187 = scmp.ne.s32.totalorder %s182, %s184
      %p188 = scmp.eq.s32.totalorder %s17, 0
      %p189 = por %p187, %p188
      %p190 = scmp.ne.s32.totalorder %s182, %s184
      %p191 = scmp.eq.s32.totalorder %s22, 1
      %p192 = por %p190, %p191
      %p193 = scmp.ne.s32.totalorder %s184, %s185
      %p194 = scmp.eq.s32.totalorder %s22, 0
      %p195 = por %p193, %p194
      %p196 = scmp.ne.s32.totalorder %s184, %s185
      %p197 = scmp.eq.s32.totalorder %s23, 1
      %p198 = por %p196, %p197
      %p200 = scmp.ne.s32.totalorder %s185, %s199
      %p201 = scmp.eq.s32.totalorder %s23, 0
      %p202 = por %p200, %p201
      %s203 = ssub.s32 %s17, %s24
      %p204 = scmp.eq.s32.totalorder %s203, 0
      %s206 = sadd.s32 %s205, 1
      %s207 = scalar_select %p204, %s205, %s206
      %p210 = pneg %p204
      %p211 = scmp.eq.s32.totalorder %s17, 1
      %p212 = por %p210, %p211
      %p213 = scmp.ne.s32.totalorder %s205, %s208
      %p214 = scmp.eq.s32.totalorder %s17, 0
      %p215 = por %p213, %p214
      %p216 = scmp.ne.s32.totalorder %s205, %s208
      %p217 = scmp.eq.s32.totalorder %s22, 1
      %p218 = por %p216, %p217
      %p219 = scmp.ne.s32.totalorder %s208, %s209
      %p220 = scmp.eq.s32.totalorder %s22, 0
      %p221 = por %p219, %p220
      %p222 = scmp.ne.s32.totalorder %s208, %s209
      %p223 = scmp.eq.s32.totalorder %s23, 1
      %p224 = por %p222, %p223
      %p226 = scmp.ne.s32.totalorder %s209, %s225
      %p227 = scmp.eq.s32.totalorder %s23, 0
      %p228 = por %p226, %p227
      %p229 = scmp.le.s32.totalorder 1, %s17
      %p230 = scmp.lt.s32.totalorder %s17, 3
      %p231 = pnand %p229, %p230
      %p232 = pneg %p231
      // Predicated region
      $region9: #{unit_gat4_forward.3} parent=5 // pred_check
        _
      $region10: #{unit_gat4_forward.3} parent=5 // pred_check_branch
        %234 = sbr.rel (%p231) target = $region12
      $region11: #{unit_gat4_forward.3} parent=5 // pred_region
        %s235 = ssub.s32 %s17, 1
        // Predicated region
        $region13: #{unit_gat4_forward.3} parent=11 // pred_check
          %p236 = pneg %p38
        $region14: #{unit_gat4_forward.3} parent=11 // pred_check_branch
          %238 = sbr.rel (%p236) target = $region16
        $region15: #{unit_gat4_forward.3} parent=11 // pred_region
          _
        $region16: #{unit_gat4_forward.3} parent=11 // pred_fallthru
          _
        // Predicated region
        $region17: #{unit_gat4_forward.3} parent=11 // pred_check
          %p239 = pneg %p111
        $region18: #{unit_gat4_forward.3} parent=11 // pred_check_branch
          %241 = sbr.rel (%p239) target = $region20
        $region19: #{unit_gat4_forward.3} parent=11 // pred_region
          _
        $region20: #{unit_gat4_forward.3} parent=11 // pred_fallthru
          _
        // Predicated region
        $region21: #{unit_gat4_forward.3} parent=11 // pred_check
          %p242 = pneg %p132
        $region22: #{unit_gat4_forward.3} parent=11 // pred_check_branch
          %244 = sbr.rel (%p242) target = $region24
        $region23: #{unit_gat4_forward.3} parent=11 // pred_region
          _
        $region24: #{unit_gat4_forward.3} parent=11 // pred_fallthru
          _
        // Predicated region
        $region25: #{unit_gat4_forward.3} parent=11 // pred_check
          %p245 = pneg %p153
        $region26: #{unit_gat4_forward.3} parent=11 // pred_check_branch
          %247 = sbr.rel (%p245) target = $region28
        $region27: #{unit_gat4_forward.3} parent=11 // pred_region
          _
        $region28: #{unit_gat4_forward.3} parent=11 // pred_fallthru
          _
        // Predicated region
        $region29: #{unit_gat4_forward.3} parent=11 // pred_check
          %p248 = pneg %p174
        $region30: #{unit_gat4_forward.3} parent=11 // pred_check_branch
          %250 = sbr.rel (%p248) target = $region32
        $region31: #{unit_gat4_forward.3} parent=11 // pred_region
          _
        $region32: #{unit_gat4_forward.3} parent=11 // pred_fallthru
          _
        // Predicated region
        $region33: #{unit_gat4_forward.3} parent=11 // pred_check
          %p251 = pneg %p195
        $region34: #{unit_gat4_forward.3} parent=11 // pred_check_branch
          %253 = sbr.rel (%p251) target = $region36
        $region35: #{unit_gat4_forward.3} parent=11 // pred_region
          _
        $region36: #{unit_gat4_forward.3} parent=11 // pred_fallthru
          _
      $region12: #{unit_gat4_forward.3} parent=5 // pred_fallthru
        _
      %p254 = scmp.lt.s32.totalorder %s17, 2
      // Predicated region
      $region37: #{unit_gat4_forward.3} parent=5 // pred_check
        %p255 = pneg %p254
      $region38: #{unit_gat4_forward.3} parent=5 // pred_check_branch
        %257 = sbr.rel (%p255) target = $region40
      $region39: #{unit_gat4_forward.3} parent=5 // pred_region
        // Predicated region
        $region41: #{unit_gat4_forward.3} parent=39 // pred_check
          %p258 = pneg %p58
        $region42: #{unit_gat4_forward.3} parent=39 // pred_check_branch
          %260 = sbr.rel (%p258) target = $region44
        $region43: #{unit_gat4_forward.3} parent=39 // pred_region
          %p261 = scmp.lt.s32.totalorder %s17, 1
          %s262 = scalar_select %p261, %s17, 1
          %s263 = smul.addr %s262, 8
          %s264 = scalar_lea.vmem %s1, %s263
        $region44: #{unit_gat4_forward.3} parent=39 // pred_fallthru
          _
        // Predicated region
        $region45: #{unit_gat4_forward.3} parent=39 // pred_check
          %p265 = pneg %p84
        $region46: #{unit_gat4_forward.3} parent=39 // pred_check_branch
          %267 = sbr.rel (%p265) target = $region48
        $region47: #{unit_gat4_forward.3} parent=39 // pred_region
          %s268 = smul.u32 8, %s17
          %p269 = scmp.lt.s32.totalorder %s268, 15
          %s270 = scalar_select %p269, %s268, 15
          %s271 = smul.addr %s270, 2
          %s272 = smul.addr %s271, 8
          %s273 = scalar_lea.vmem %s2, %s272
          %s274 = smul.u32 8, %s17
        $region48: #{unit_gat4_forward.3} parent=39 // pred_fallthru
          _
      $region40: #{unit_gat4_forward.3} parent=5 // pred_fallthru
        _
      %p275 = scmp.le.s32.totalorder 1, %s17
      %p276 = scmp.lt.s32.totalorder %s17, 3
      %p277 = pnand %p275, %p276
      %p278 = pneg %p277
      // Predicated region
      $region49: #{unit_gat4_forward.3} parent=5 // pred_check
        _
      $region50: #{unit_gat4_forward.3} parent=5 // pred_check_branch
        %280 = sbr.rel (%p277) target = $region52
      $region51: #{unit_gat4_forward.3} parent=5 // pred_region
        %s281 = ssub.s32 %s17, 1
        %p282 = pneg %p38
        %p283 = pneg %p35
        %p284 = scmp.lt.s32.totalorder %s22, 1
        %s285 = scalar_select %p284, %s22, 1
        %s286 = smul.addr %s285, 8
        %s287 = scalar_lea.vmem %s1, %s286
        %p288 = pneg %p64
        %p289 = pneg %p61
        %s290 = smul.u32 8, %s22
        %p291 = scmp.lt.s32.totalorder %s290, 15
        %s292 = scalar_select %p291, %s290, 15
        %s293 = smul.addr %s292, 2
        %s294 = smul.addr %s293, 8
        %s295 = scalar_lea.vmem %s2, %s294
        %p296 = pneg %p90
        %p297 = pneg %p87
        %p298 = pneg %p111
        %p299 = pneg %p108
        %p300 = pneg %p132
        %p301 = pneg %p129
        %p302 = pneg %p153
        %p303 = pneg %p150
        %p304 = pneg %p174
        %p305 = pneg %p171
        %p306 = pneg %p195
        %p307 = pneg %p192
        %p308 = pneg %p221
        %p309 = pneg %p218
        %s310 = sand.u32 %s208, 1
        %s311 = scalar_lea.sflag [#allocation3], %s310
        %s312 = sand.u32 %s208, 1
        %s313 = smul.addr %s312, 8
        %s314 = scalar_lea.vmem [#allocation2], %s313
        %p315 = scmp.lt.s32.totalorder %s22, 1
        %s316 = scalar_select %p315, %s22, 1
        %s317 = smul.addr %s316, 8
        %s318 = scalar_lea.vmem %s1, %s317
        %s319 = smul.u32 8, %s22
        %p320 = scmp.lt.s32.totalorder %s319, 15
        %s321 = scalar_select %p320, %s319, 15
        %s322 = smul.addr %s321, 2
        %s323 = smul.addr %s322, 8
        %s324 = scalar_lea.vmem %s2, %s323
        %s325 = smul.u32 8, %s22
        %v327 = vld [vmem:[%s0] sm:$0xff]
        %v328 = vld [vmem:[%s0 + $0x8] sm:$0xff]
        %v329 = vpack.c.bf16 %v328, %v327
        %v330 = vld [vmem:[%s3] sm:$0xf]
        %v331 = vld [vmem:[%s3 + $0x4] sm:$0xf]
        %v332 = vld [vmem:[%s3 + $0x8] sm:$0xf]
        %v333 = vld [vmem:[%s3 + $0xc] sm:$0xf]
        %v334 = vld [vmem:[%s3 + $0x10] sm:$0xf]
        %v335 = vld [vmem:[%s3 + $0x14] sm:$0xf]
        %v336 = vld [vmem:[%s3 + $0x18] sm:$0xf]
        %v337 = vld [vmem:[%s3 + $0x1c] sm:$0xf]
        %v338 = vld [vmem:[%s3 + $0x20] sm:$0xf]
        %v339 = vld [vmem:[%s3 + $0x24] sm:$0xf]
        %v340 = vld [vmem:[%s3 + $0x28] sm:$0xf]
        %v341 = vld [vmem:[%s3 + $0x2c] sm:$0xf]
        %v342 = vld [vmem:[%s3 + $0x30] sm:$0xf]
        %v343 = vld [vmem:[%s3 + $0x34] sm:$0xf]
        %v344 = vld [vmem:[%s3 + $0x38] sm:$0xf]
        %v345 = vld [vmem:[%s3 + $0x3c] sm:$0xf]
        %v346 = vld [vmem:[%s4] sm:$0x1]
        %v348 = vlaneseq
        %v349 = vshrl.u32 %v348, 7
        %v350 = vsub.s32 0, %v349
        %v351 = vrot.slane %v346, %v350
        %v369 = vunpack.c.l.b16 %v330
        %v370 = vunpack.c.l.b16 %v331
        %v371 = vunpack.c.l.b16 %v332
        %v372 = vunpack.c.l.b16 %v333
        %v373 = vunpack.c.l.b16 %v334
        %v374 = vunpack.c.l.b16 %v335
        %v375 = vunpack.c.l.b16 %v336
        %v376 = vunpack.c.l.b16 %v337
        %v377 = vunpack.c.l.b16 %v338
        %v378 = vunpack.c.l.b16 %v339
        %v379 = vunpack.c.l.b16 %v340
        %v380 = vunpack.c.l.b16 %v341
        %v381 = vunpack.c.l.b16 %v342
        %v382 = vunpack.c.l.b16 %v343
        %v383 = vunpack.c.l.b16 %v344
        %v384 = vunpack.c.l.b16 %v345
        %v385 = vpack.c.b16 %v370, %v369
        %v386 = vpack.c.b16 %v372, %v371
        %v387 = vpack.c.b16 %v374, %v373
        %v388 = vpack.c.b16 %v376, %v375
        %v389 = vpack.c.b16 %v378, %v377
        %v390 = vpack.c.b16 %v380, %v379
        %v391 = vpack.c.b16 %v382, %v381
        %v392 = vpack.c.b16 %v384, %v383
        %401 = vmatprep.subr.bf16.mxu0 0
        %402 = vmatpush1.bf16.msra.mxu0 %v392
        %403 = vmatprep.subr.bf16.mxu0 0
        %404 = vmatpush1.bf16.msra.mxu0 %v391
        %405 = vmatprep.subr.bf16.mxu0 0
        %406 = vmatpush1.bf16.msra.mxu0 %v390
        %407 = vmatprep.subr.bf16.mxu0 0
        %408 = vmatpush1.bf16.msra.mxu0 %v389
        %409 = vmatprep.subr.bf16.mxu0 0
        %410 = vmatpush1.bf16.msra.mxu0 %v388
        %411 = vmatprep.subr.bf16.mxu0 0
        %412 = vmatpush1.bf16.msra.mxu0 %v387
        %413 = vmatprep.subr.bf16.mxu0 0
        %414 = vmatpush1.bf16.msra.mxu0 %v386
        %415 = vmatprep.subr.bf16.mxu0 0
        %416 = vmatpush1.bf16.msra.mxu0 %v385
        %417 = vmatprep.subr.bf16.mxu0 0
        %418 = vmatpush2.bf16.msra.mxu0 0
        %419 = vmatprep.subr.bf16.mxu0 0
        %420 = vmatpush2.bf16.msra.mxu0 0
        %421 = vmatprep.subr.bf16.mxu0 0
        %422 = vmatpush2.bf16.msra.mxu0 0
        %423 = vmatprep.subr.bf16.mxu0 0
        %424 = vmatpush2.bf16.msra.mxu0 0
        %425 = vmatprep.subr.bf16.mxu0 0
        %426 = vmatpush2.bf16.msra.mxu0 0
        %427 = vmatprep.subr.bf16.mxu0 0
        %428 = vmatpush2.bf16.msra.mxu0 0
        %429 = vmatprep.subr.bf16.mxu0 0
        %430 = vmatpush2.bf16.msra.mxu0 0
        %431 = vmatprep.subr.bf16.mxu0 0
        %432 = vmatpush2.bf16.msra.mxu0 0
        %433 = vmatprep.mubr.bf16.mxu0 0
        %434 = vmatmul.mubr.bf16.gmra.mxu0 %v329
        %v435 = vpop.f32.mrf.mxu0
        %v436 = vadd.f32 %v351, %v435
        %v437 = vpop.f32.mrf.mxu0
        %v438 = vpop.f32.mrf.mxu0
        %v439 = vadd.f32 %v351, %v438
        %v440 = vpop.f32.mrf.mxu0
        %441 = vdwg.mxu0
        %v442 = vld [vmem:[%s318] sm:$0xff]
        %v443 = vpack.c.bf16 %v442, %v442
        %v444 = vld [vmem:[%s5] sm:$0xff]
        %v445 = vld [vmem:[%s5 + $0x8] sm:$0xff]
        %v446 = vld [vmem:[%s5 + $0x10] sm:$0xff]
        %v447 = vld [vmem:[%s5 + $0x18] sm:$0xff]
        %v448 = vld [vmem:[%s5 + $0x20] sm:$0xff]
        %v449 = vld [vmem:[%s5 + $0x28] sm:$0xff]
        %v450 = vld [vmem:[%s5 + $0x30] sm:$0xff]
        %v451 = vld [vmem:[%s5 + $0x38] sm:$0xff]
        %v452 = vld [vmem:[%s5 + $0x40] sm:$0xff]
        %v453 = vld [vmem:[%s5 + $0x48] sm:$0xff]
        %v454 = vld [vmem:[%s5 + $0x50] sm:$0xff]
        %v455 = vld [vmem:[%s5 + $0x58] sm:$0xff]
        %v456 = vld [vmem:[%s5 + $0x60] sm:$0xff]
        %v457 = vld [vmem:[%s5 + $0x68] sm:$0xff]
        %v458 = vld [vmem:[%s5 + $0x70] sm:$0xff]
        %v459 = vld [vmem:[%s5 + $0x78] sm:$0xff]
        %v460 = vld [vmem:[%s6] sm:$0x3]
        %v462 = vlaneseq
        %v463 = vshrl.u32 %v462, 7
        %v464 = vsub.s32 0, %v463
        %v465 = vrot.slane %v460, %v464
        %v466 = vlaneseq
        %v467 = vshrl.u32 %v466, 7
        %v468 = vsub.s32 1, %v467
        %v469 = vrot.slane %v460, %v468
        %v488 = vunpack.c.l.b16 %v444
        %v489 = vunpack.c.h.b16 %v444
        %v490 = vunpack.c.l.b16 %v445
        %v491 = vunpack.c.h.b16 %v445
        %v492 = vunpack.c.l.b16 %v446
        %v493 = vunpack.c.h.b16 %v446
        %v494 = vunpack.c.l.b16 %v447
        %v495 = vunpack.c.h.b16 %v447
        %v496 = vunpack.c.l.b16 %v448
        %v497 = vunpack.c.h.b16 %v448
        %v498 = vunpack.c.l.b16 %v449
        %v499 = vunpack.c.h.b16 %v449
        %v500 = vunpack.c.l.b16 %v450
        %v501 = vunpack.c.h.b16 %v450
        %v502 = vunpack.c.l.b16 %v451
        %v503 = vunpack.c.h.b16 %v451
        %v504 = vunpack.c.l.b16 %v452
        %v505 = vunpack.c.h.b16 %v452
        %v506 = vunpack.c.l.b16 %v453
        %v507 = vunpack.c.h.b16 %v453
        %v508 = vunpack.c.l.b16 %v454
        %v509 = vunpack.c.h.b16 %v454
        %v510 = vunpack.c.l.b16 %v455
        %v511 = vunpack.c.h.b16 %v455
        %v512 = vunpack.c.l.b16 %v456
        %v513 = vunpack.c.h.b16 %v456
        %v514 = vunpack.c.l.b16 %v457
        %v515 = vunpack.c.h.b16 %v457
        %v516 = vunpack.c.l.b16 %v458
        %v517 = vunpack.c.h.b16 %v458
        %v518 = vunpack.c.l.b16 %v459
        %v519 = vunpack.c.h.b16 %v459
        %v520 = vpack.c.b16 %v490, %v488
        %v521 = vpack.c.b16 %v491, %v489
        %v522 = vpack.c.b16 %v494, %v492
        %v523 = vpack.c.b16 %v495, %v493
        %v524 = vpack.c.b16 %v498, %v496
        %v525 = vpack.c.b16 %v499, %v497
        %v526 = vpack.c.b16 %v502, %v500
        %v527 = vpack.c.b16 %v503, %v501
        %v528 = vpack.c.b16 %v506, %v504
        %v529 = vpack.c.b16 %v507, %v505
        %v530 = vpack.c.b16 %v510, %v508
        %v531 = vpack.c.b16 %v511, %v509
        %v532 = vpack.c.b16 %v514, %v512
        %v533 = vpack.c.b16 %v515, %v513
        %v534 = vpack.c.b16 %v518, %v516
        %v535 = vpack.c.b16 %v519, %v517
        %552 = vmatprep.subr.bf16.mxu0 %v535
        %553 = vmatpush1.bf16.msra.mxu0 %v534
        %554 = vmatprep.subr.bf16.mxu0 %v533
        %555 = vmatpush1.bf16.msra.mxu0 %v532
        %556 = vmatprep.subr.bf16.mxu0 %v531
        %557 = vmatpush1.bf16.msra.mxu0 %v530
        %558 = vmatprep.subr.bf16.mxu0 %v529
        %559 = vmatpush1.bf16.msra.mxu0 %v528
        %560 = vmatprep.subr.bf16.mxu0 %v527
        %561 = vmatpush1.bf16.msra.mxu0 %v526
        %562 = vmatprep.subr.bf16.mxu0 %v525
        %563 = vmatpush1.bf16.msra.mxu0 %v524
        %564 = vmatprep.subr.bf16.mxu0 %v523
        %565 = vmatpush1.bf16.msra.mxu0 %v522
        %566 = vmatprep.subr.bf16.mxu0 %v521
        %567 = vmatpush1.bf16.msra.mxu0 %v520
        %568 = vmatprep.subr.bf16.mxu0 0
        %569 = vmatpush2.bf16.msra.mxu0 0
        %570 = vmatprep.subr.bf16.mxu0 0
        %571 = vmatpush2.bf16.msra.mxu0 0
        %572 = vmatprep.subr.bf16.mxu0 0
        %573 = vmatpush2.bf16.msra.mxu0 0
        %574 = vmatprep.subr.bf16.mxu0 0
        %575 = vmatpush2.bf16.msra.mxu0 0
        %576 = vmatprep.subr.bf16.mxu0 0
        %577 = vmatpush2.bf16.msra.mxu0 0
        %578 = vmatprep.subr.bf16.mxu0 0
        %579 = vmatpush2.bf16.msra.mxu0 0
        %580 = vmatprep.subr.bf16.mxu0 0
        %581 = vmatpush2.bf16.msra.mxu0 0
        %582 = vmatprep.subr.bf16.mxu0 0
        %583 = vmatpush2.bf16.msra.mxu0 0
        %584 = vmatprep.mubr.bf16.mxu0 0
        %585 = vmatmul.mubr.bf16.gmra.mxu0 %v443
        %v586 = vpop.f32.mrf.mxu0
        %v587 = vadd.f32 %v465, %v586
        %v588 = vpop.f32.mrf.mxu0
        %v589 = vadd.f32 %v469, %v588
        %v590 = vpop.f32.mrf.mxu0
        %v591 = vpop.f32.mrf.mxu0
        %592 = vdwg.mxu0
        %v594 = vcombine.high %v587, %v587
        %v596 = vunpack.c.l.s4 1966171168
        %v597 = vunpack.c.0.s8 %v596
        %v598 = vlaneseq
        %v599 = vshrl.u32 %v598, 7
        %v600 = vsub.s32 %v597, %v599
        %v601 = vrot.slane %v587, %v600
        %v603 = vunpack.c.l.s4 1966171168
        %v604 = vunpack.c.0.s8 %v603
        %v605 = vlaneseq
        %v606 = vshrl.u32 %v605, 7
        %v607 = vsub.s32 %v604, %v606
        %v608 = vrot.slane %v594, %v607
        %v609 = vcombine.high %v601, %v601
        %v610 = vcombine.high %v608, %v608
        %v612 = vunpack.c.l.s4 1966171168
        %v613 = vunpack.c.0.s8 %v612
        %v614 = vlaneseq
        %v615 = vshrl.u32 %v614, 7
        %v616 = vsub.s32 %v613, %v615
        %v617 = vrot.slane %v601, %v616
        %v619 = vunpack.c.l.s4 1966171168
        %v620 = vunpack.c.0.s8 %v619
        %v621 = vlaneseq
        %v622 = vshrl.u32 %v621, 7
        %v623 = vsub.s32 %v620, %v622
        %v624 = vrot.slane %v608, %v623
        %v626 = vunpack.c.l.s4 1966171168
        %v627 = vunpack.c.0.s8 %v626
        %v628 = vlaneseq
        %v629 = vshrl.u32 %v628, 7
        %v630 = vsub.s32 %v627, %v629
        %v631 = vrot.slane %v609, %v630
        %v633 = vunpack.c.l.s4 1966171168
        %v634 = vunpack.c.0.s8 %v633
        %v635 = vlaneseq
        %v636 = vshrl.u32 %v635, 7
        %v637 = vsub.s32 %v634, %v636
        %v638 = vrot.slane %v610, %v637
        %v639 = vcombine.high %v617, %v617
        %v640 = vcombine.high %v624, %v624
        %v641 = vcombine.high %v631, %v631
        %v642 = vcombine.high %v638, %v638
        %v643 = vlaneseq
        %v644 = vshrl.u32 %v643, 7
        %v645 = vsub.s32 0, %v644
        %v646 = vrot.slane %v617, %v645
        %v647 = vlaneseq
        %v648 = vshrl.u32 %v647, 7
        %v649 = vsub.s32 0, %v648
        %v650 = vrot.slane %v631, %v649
        %v651 = vlaneseq
        %v652 = vshrl.u32 %v651, 7
        %v653 = vsub.s32 0, %v652
        %v654 = vrot.slane %v639, %v653
        %v655 = vlaneseq
        %v656 = vshrl.u32 %v655, 7
        %v657 = vsub.s32 0, %v656
        %v658 = vrot.slane %v641, %v657
        %v659 = vlaneseq
        %v660 = vshrl.u32 %v659, 7
        %v661 = vsub.s32 0, %v660
        %v662 = vrot.slane %v624, %v661
        %v663 = vlaneseq
        %v664 = vshrl.u32 %v663, 7
        %v665 = vsub.s32 0, %v664
        %v666 = vrot.slane %v638, %v665
        %v667 = vlaneseq
        %v668 = vshrl.u32 %v667, 7
        %v669 = vsub.s32 0, %v668
        %v670 = vrot.slane %v640, %v669
        %v671 = vlaneseq
        %v672 = vshrl.u32 %v671, 7
        %v673 = vsub.s32 0, %v672
        %v674 = vrot.slane %v642, %v673
        %v683 = vadd.f32 %v436, %v646
        %v684 = vadd.f32 %v439, %v646
        %v685 = vadd.f32 %v436, %v650
        %v686 = vadd.f32 %v439, %v650
        %v687 = vadd.f32 %v436, %v654
        %v688 = vadd.f32 %v439, %v654
        %v689 = vadd.f32 %v436, %v658
        %v690 = vadd.f32 %v439, %v658
        %v691 = vadd.f32 %v436, %v662
        %v692 = vadd.f32 %v439, %v662
        %v693 = vadd.f32 %v436, %v666
        %v694 = vadd.f32 %v439, %v666
        %v695 = vadd.f32 %v436, %v670
        %v696 = vadd.f32 %v439, %v670
        %v697 = vadd.f32 %v436, %v674
        %v698 = vadd.f32 %v439, %v674
        %vm699 = vcmp.ge.f32.partialorder %v683, 0.0
        %vm700 = vcmp.ge.f32.partialorder %v684, 0.0
        %vm701 = vcmp.ge.f32.partialorder %v685, 0.0
        %vm702 = vcmp.ge.f32.partialorder %v686, 0.0
        %vm703 = vcmp.ge.f32.partialorder %v687, 0.0
        %vm704 = vcmp.ge.f32.partialorder %v688, 0.0
        %vm705 = vcmp.ge.f32.partialorder %v689, 0.0
        %vm706 = vcmp.ge.f32.partialorder %v690, 0.0
        %vm707 = vcmp.ge.f32.partialorder %v691, 0.0
        %vm708 = vcmp.ge.f32.partialorder %v692, 0.0
        %vm709 = vcmp.ge.f32.partialorder %v693, 0.0
        %vm710 = vcmp.ge.f32.partialorder %v694, 0.0
        %vm711 = vcmp.ge.f32.partialorder %v695, 0.0
        %vm712 = vcmp.ge.f32.partialorder %v696, 0.0
        %vm713 = vcmp.ge.f32.partialorder %v697, 0.0
        %vm714 = vcmp.ge.f32.partialorder %v698, 0.0
        %v715 = vmul.f32 %v683, 0.2
        %v716 = vmul.f32 %v684, 0.2
        %v717 = vmul.f32 %v685, 0.2
        %v718 = vmul.f32 %v686, 0.2
        %v719 = vmul.f32 %v687, 0.2
        %v720 = vmul.f32 %v688, 0.2
        %v721 = vmul.f32 %v689, 0.2
        %v722 = vmul.f32 %v690, 0.2
        %v723 = vmul.f32 %v691, 0.2
        %v724 = vmul.f32 %v692, 0.2
        %v725 = vmul.f32 %v693, 0.2
        %v726 = vmul.f32 %v694, 0.2
        %v727 = vmul.f32 %v695, 0.2
        %v728 = vmul.f32 %v696, 0.2
        %v729 = vmul.f32 %v697, 0.2
        %v730 = vmul.f32 %v698, 0.2
        %v731 = vsel %vm699, %v683, %v715
        %v732 = vsel %vm700, %v684, %v716
        %v733 = vsel %vm701, %v685, %v717
        %v734 = vsel %vm702, %v686, %v718
        %v735 = vsel %vm703, %v687, %v719
        %v736 = vsel %vm704, %v688, %v720
        %v737 = vsel %vm705, %v689, %v721
        %v738 = vsel %vm706, %v690, %v722
        %v739 = vsel %vm707, %v691, %v723
        %v740 = vsel %vm708, %v692, %v724
        %v741 = vsel %vm709, %v693, %v725
        %v742 = vsel %vm710, %v694, %v726
        %v743 = vsel %vm711, %v695, %v727
        %v744 = vsel %vm712, %v696, %v728
        %v745 = vsel %vm713, %v697, %v729
        %v746 = vsel %vm714, %v698, %v730
        %v747 = vpack.c.bf16 %v732, %v731
        %v748 = vpack.c.bf16 %v734, %v733
        %v749 = vpack.c.bf16 %v736, %v735
        %v750 = vpack.c.bf16 %v738, %v737
        %v751 = vpack.c.bf16 %v740, %v739
        %v752 = vpack.c.bf16 %v742, %v741
        %v753 = vpack.c.bf16 %v744, %v743
        %v754 = vpack.c.bf16 %v746, %v745
        %v755 = vld [vmem:[%s7] sm:$0xf]
        %v756 = vld [vmem:[%s7 + $0x4] sm:$0xf]
        %v757 = vld [vmem:[%s7 + $0x8] sm:$0xf]
        %v758 = vld [vmem:[%s7 + $0xc] sm:$0xf]
        %v759 = vld [vmem:[%s7 + $0x10] sm:$0xf]
        %v760 = vld [vmem:[%s7 + $0x14] sm:$0xf]
        %v761 = vld [vmem:[%s7 + $0x18] sm:$0xf]
        %v762 = vld [vmem:[%s7 + $0x1c] sm:$0xf]
        %v763 = vld [vmem:[%s7 + $0x20] sm:$0xf]
        %v764 = vld [vmem:[%s7 + $0x24] sm:$0xf]
        %v765 = vld [vmem:[%s7 + $0x28] sm:$0xf]
        %v766 = vld [vmem:[%s7 + $0x2c] sm:$0xf]
        %v767 = vld [vmem:[%s7 + $0x30] sm:$0xf]
        %v768 = vld [vmem:[%s7 + $0x34] sm:$0xf]
        %v769 = vld [vmem:[%s7 + $0x38] sm:$0xf]
        %v770 = vld [vmem:[%s7 + $0x3c] sm:$0xf]
        %v787 = vunpack.c.l.b16 %v755
        %v788 = vunpack.c.l.b16 %v756
        %v789 = vunpack.c.l.b16 %v757
        %v790 = vunpack.c.l.b16 %v758
        %v791 = vunpack.c.l.b16 %v759
        %v792 = vunpack.c.l.b16 %v760
        %v793 = vunpack.c.l.b16 %v761
        %v794 = vunpack.c.l.b16 %v762
        %v795 = vunpack.c.l.b16 %v763
        %v796 = vunpack.c.l.b16 %v764
        %v797 = vunpack.c.l.b16 %v765
        %v798 = vunpack.c.l.b16 %v766
        %v799 = vunpack.c.l.b16 %v767
        %v800 = vunpack.c.l.b16 %v768
        %v801 = vunpack.c.l.b16 %v769
        %v802 = vunpack.c.l.b16 %v770
        %v803 = vpack.c.b16 %v788, %v787
        %v804 = vpack.c.b16 %v790, %v789
        %v805 = vpack.c.b16 %v792, %v791
        %v806 = vpack.c.b16 %v794, %v793
        %v807 = vpack.c.b16 %v796, %v795
        %v808 = vpack.c.b16 %v798, %v797
        %v809 = vpack.c.b16 %v800, %v799
        %v810 = vpack.c.b16 %v802, %v801
        %819 = vmatprep.subr.bf16.mxu0 0
        %820 = vmatpush1.bf16.msra.mxu0 %v810
        %821 = vmatprep.subr.bf16.mxu0 0
        %822 = vmatpush1.bf16.msra.mxu0 %v809
        %823 = vmatprep.subr.bf16.mxu0 0
        %824 = vmatpush1.bf16.msra.mxu0 %v808
        %825 = vmatprep.subr.bf16.mxu0 0
        %826 = vmatpush1.bf16.msra.mxu0 %v807
        %827 = vmatprep.subr.bf16.mxu0 0
        %828 = vmatpush1.bf16.msra.mxu0 %v806
        %829 = vmatprep.subr.bf16.mxu0 0
        %830 = vmatpush1.bf16.msra.mxu0 %v805
        %831 = vmatprep.subr.bf16.mxu0 0
        %832 = vmatpush1.bf16.msra.mxu0 %v804
        %833 = vmatprep.subr.bf16.mxu0 0
        %834 = vmatpush1.bf16.msra.mxu0 %v803
        %835 = vmatprep.subr.bf16.mxu0 0
        %836 = vmatpush2.bf16.msra.mxu0 0
        %837 = vmatprep.subr.bf16.mxu0 0
        %838 = vmatpush2.bf16.msra.mxu0 0
        %839 = vmatprep.subr.bf16.mxu0 0
        %840 = vmatpush2.bf16.msra.mxu0 0
        %841 = vmatprep.subr.bf16.mxu0 0
        %842 = vmatpush2.bf16.msra.mxu0 0
        %843 = vmatprep.subr.bf16.mxu0 0
        %844 = vmatpush2.bf16.msra.mxu0 0
        %845 = vmatprep.subr.bf16.mxu0 0
        %846 = vmatpush2.bf16.msra.mxu0 0
        %847 = vmatprep.subr.bf16.mxu0 0
        %848 = vmatpush2.bf16.msra.mxu0 0
        %849 = vmatprep.subr.bf16.mxu0 0
        %850 = vmatpush2.bf16.msra.mxu0 0
        %851 = vmatprep.mubr.bf16.mxu0 0
        %852 = vmatmul.mubr.bf16.gmra.mxu0 %v747
        %v853 = vpop.f32.mrf.mxu0
        %v854 = vadd.f32 0.0, %v853
        %v855 = vpop.f32.mrf.mxu0
        %v856 = vpop.f32.mrf.mxu0
        %v857 = vadd.f32 0.0, %v856
        %v858 = vpop.f32.mrf.mxu0
        %859 = vmatprep.mubr.bf16.mxu0 0
        %860 = vmatmul.mubr.bf16.gmra.mxu0 %v748
        %v861 = vpop.f32.mrf.mxu0
        %v862 = vadd.f32 0.0, %v861
        %v863 = vpop.f32.mrf.mxu0
        %v864 = vpop.f32.mrf.mxu0
        %v865 = vadd.f32 0.0, %v864
        %v866 = vpop.f32.mrf.mxu0
        %867 = vmatprep.mubr.bf16.mxu0 0
        %868 = vmatmul.mubr.bf16.gmra.mxu0 %v749
        %v869 = vpop.f32.mrf.mxu0
        %v870 = vadd.f32 0.0, %v869
        %v871 = vpop.f32.mrf.mxu0
        %v872 = vpop.f32.mrf.mxu0
        %v873 = vadd.f32 0.0, %v872
        %v874 = vpop.f32.mrf.mxu0
        %875 = vmatprep.mubr.bf16.mxu0 0
        %876 = vmatmul.mubr.bf16.gmra.mxu0 %v750
        %v877 = vpop.f32.mrf.mxu0
        %v878 = vadd.f32 0.0, %v877
        %v879 = vpop.f32.mrf.mxu0
        %v880 = vpop.f32.mrf.mxu0
        %v881 = vadd.f32 0.0, %v880
        %v882 = vpop.f32.mrf.mxu0
        %883 = vmatprep.mubr.bf16.mxu0 0
        %884 = vmatmul.mubr.bf16.gmra.mxu0 %v751
        %v885 = vpop.f32.mrf.mxu0
        %v886 = vadd.f32 0.0, %v885
        %v887 = vpop.f32.mrf.mxu0
        %v888 = vpop.f32.mrf.mxu0
        %v889 = vadd.f32 0.0, %v888
        %v890 = vpop.f32.mrf.mxu0
        %891 = vmatprep.mubr.bf16.mxu0 0
        %892 = vmatmul.mubr.bf16.gmra.mxu0 %v752
        %v893 = vpop.f32.mrf.mxu0
        %v894 = vadd.f32 0.0, %v893
        %v895 = vpop.f32.mrf.mxu0
        %v896 = vpop.f32.mrf.mxu0
        %v897 = vadd.f32 0.0, %v896
        %v898 = vpop.f32.mrf.mxu0
        %899 = vmatprep.mubr.bf16.mxu0 0
        %900 = vmatmul.mubr.bf16.gmra.mxu0 %v753
        %v901 = vpop.f32.mrf.mxu0
        %v902 = vadd.f32 0.0, %v901
        %v903 = vpop.f32.mrf.mxu0
        %v904 = vpop.f32.mrf.mxu0
        %v905 = vadd.f32 0.0, %v904
        %v906 = vpop.f32.mrf.mxu0
        %907 = vmatprep.mubr.bf16.mxu0 0
        %908 = vmatmul.mubr.bf16.gmra.mxu0 %v754
        %v909 = vpop.f32.mrf.mxu0
        %v910 = vadd.f32 0.0, %v909
        %v911 = vpop.f32.mrf.mxu0
        %v912 = vpop.f32.mrf.mxu0
        %v913 = vadd.f32 0.0, %v912
        %v914 = vpop.f32.mrf.mxu0
        %915 = vdwg.mxu0
        %v916 = vld [vmem:[%s324] sm:$0xff]
        %v917 = vld [vmem:[%s324 + $0x8] sm:$0xff]
        %v918 = vld [vmem:[%s324 + $0x10] sm:$0xff]
        %v919 = vld [vmem:[%s324 + $0x18] sm:$0xff]
        %v920 = vld [vmem:[%s324 + $0x20] sm:$0xff]
        %v921 = vld [vmem:[%s324 + $0x28] sm:$0xff]
        %v922 = vld [vmem:[%s324 + $0x30] sm:$0xff]
        %v923 = vld [vmem:[%s324 + $0x38] sm:$0xff]
        %v924 = vld [vmem:[%s324 + $0x40] sm:$0xff]
        %v925 = vld [vmem:[%s324 + $0x48] sm:$0xff]
        %v926 = vld [vmem:[%s324 + $0x50] sm:$0xff]
        %v927 = vld [vmem:[%s324 + $0x58] sm:$0xff]
        %v928 = vld [vmem:[%s324 + $0x60] sm:$0xff]
        %v929 = vld [vmem:[%s324 + $0x68] sm:$0xff]
        %v930 = vld [vmem:[%s324 + $0x70] sm:$0xff]
        %v931 = vld [vmem:[%s324 + $0x78] sm:$0xff]
        %vm932 = vcmp.gt.f32.partialorder %v916, 0.0
        %vm933 = vcmp.gt.f32.partialorder %v917, 0.0
        %vm934 = vcmp.gt.f32.partialorder %v918, 0.0
        %vm935 = vcmp.gt.f32.partialorder %v919, 0.0
        %vm936 = vcmp.gt.f32.partialorder %v920, 0.0
        %vm937 = vcmp.gt.f32.partialorder %v921, 0.0
        %vm938 = vcmp.gt.f32.partialorder %v922, 0.0
        %vm939 = vcmp.gt.f32.partialorder %v923, 0.0
        %vm940 = vcmp.gt.f32.partialorder %v924, 0.0
        %vm941 = vcmp.gt.f32.partialorder %v925, 0.0
        %vm942 = vcmp.gt.f32.partialorder %v926, 0.0
        %vm943 = vcmp.gt.f32.partialorder %v927, 0.0
        %vm944 = vcmp.gt.f32.partialorder %v928, 0.0
        %vm945 = vcmp.gt.f32.partialorder %v929, 0.0
        %vm946 = vcmp.gt.f32.partialorder %v930, 0.0
        %vm947 = vcmp.gt.f32.partialorder %v931, 0.0
        %v948 = vsel %vm932, 1, 0
        %v949 = vsel %vm933, 1, 0
        %v950 = vsel %vm934, 1, 0
        %v951 = vsel %vm935, 1, 0
        %v952 = vsel %vm936, 1, 0
        %v953 = vsel %vm937, 1, 0
        %v954 = vsel %vm938, 1, 0
        %v955 = vsel %vm939, 1, 0
        %v956 = vsel %vm940, 1, 0
        %v957 = vsel %vm941, 1, 0
        %v958 = vsel %vm942, 1, 0
        %v959 = vsel %vm943, 1, 0
        %v960 = vsel %vm944, 1, 0
        %v961 = vsel %vm945, 1, 0
        %v962 = vsel %vm946, 1, 0
        %v963 = vsel %vm947, 1, 0
        %964 = vset.pattern.permute.xlu0 0
        %965 = vperm.xlu0 %964, %v948
        %v966 = vpop.permute.xlu0 %965
        %967 = vset.pattern.permute.xlu0 0
        %968 = vperm.xlu0 %967, %v949
        %v969 = vpop.permute.xlu0 %968
        %970 = vset.pattern.permute.xlu0 0
        %971 = vperm.xlu0 %970, %v950
        %v972 = vpop.permute.xlu0 %971
        %973 = vset.pattern.permute.xlu0 0
        %974 = vperm.xlu0 %973, %v951
        %v975 = vpop.permute.xlu0 %974
        %976 = vset.pattern.permute.xlu0 0
        %977 = vperm.xlu0 %976, %v952
        %v978 = vpop.permute.xlu0 %977
        %979 = vset.pattern.permute.xlu0 0
        %980 = vperm.xlu0 %979, %v953
        %v981 = vpop.permute.xlu0 %980
        %982 = vset.pattern.permute.xlu0 0
        %983 = vperm.xlu0 %982, %v954
        %v984 = vpop.permute.xlu0 %983
        %985 = vset.pattern.permute.xlu0 0
        %986 = vperm.xlu0 %985, %v955
        %v987 = vpop.permute.xlu0 %986
        %988 = vset.pattern.permute.xlu0 0
        %989 = vperm.xlu0 %988, %v956
        %v990 = vpop.permute.xlu0 %989
        %991 = vset.pattern.permute.xlu0 0
        %992 = vperm.xlu0 %991, %v957
        %v993 = vpop.permute.xlu0 %992
        %994 = vset.pattern.permute.xlu0 0
        %995 = vperm.xlu0 %994, %v958
        %v996 = vpop.permute.xlu0 %995
        %997 = vset.pattern.permute.xlu0 0
        %998 = vperm.xlu0 %997, %v959
        %v999 = vpop.permute.xlu0 %998
        %1000 = vset.pattern.permute.xlu0 0
        %1001 = vperm.xlu0 %1000, %v960
        %v1002 = vpop.permute.xlu0 %1001
        %1003 = vset.pattern.permute.xlu0 0
        %1004 = vperm.xlu0 %1003, %v961
        %v1005 = vpop.permute.xlu0 %1004
        %1006 = vset.pattern.permute.xlu0 0
        %1007 = vperm.xlu0 %1006, %v962
        %v1008 = vpop.permute.xlu0 %1007
        %1009 = vset.pattern.permute.xlu0 0
        %1010 = vperm.xlu0 %1009, %v963
        %v1011 = vpop.permute.xlu0 %1010
        %vm1012 = vcmp.eq.s32.totalorder %v966, 1
        %vm1013 = vcmp.eq.s32.totalorder %v969, 1
        %vm1014 = vcmp.eq.s32.totalorder %v972, 1
        %vm1015 = vcmp.eq.s32.totalorder %v975, 1
        %vm1016 = vcmp.eq.s32.totalorder %v978, 1
        %vm1017 = vcmp.eq.s32.totalorder %v981, 1
        %vm1018 = vcmp.eq.s32.totalorder %v984, 1
        %vm1019 = vcmp.eq.s32.totalorder %v987, 1
        %vm1020 = vcmp.eq.s32.totalorder %v990, 1
        %vm1021 = vcmp.eq.s32.totalorder %v993, 1
        %vm1022 = vcmp.eq.s32.totalorder %v996, 1
        %vm1023 = vcmp.eq.s32.totalorder %v999, 1
        %vm1024 = vcmp.eq.s32.totalorder %v1002, 1
        %vm1025 = vcmp.eq.s32.totalorder %v1005, 1
        %vm1026 = vcmp.eq.s32.totalorder %v1008, 1
        %vm1027 = vcmp.eq.s32.totalorder %v1011, 1
        %v1028 = vsel %vm1012, %v854, -1e+30
        %v1029 = vsel %vm1013, %v857, -1e+30
        %v1030 = vsel %vm1014, %v862, -1e+30
        %v1031 = vsel %vm1015, %v865, -1e+30
        %v1032 = vsel %vm1016, %v870, -1e+30
        %v1033 = vsel %vm1017, %v873, -1e+30
        %v1034 = vsel %vm1018, %v878, -1e+30
        %v1035 = vsel %vm1019, %v881, -1e+30
        %v1036 = vsel %vm1020, %v886, -1e+30
        %v1037 = vsel %vm1021, %v889, -1e+30
        %v1038 = vsel %vm1022, %v894, -1e+30
        %v1039 = vsel %vm1023, %v897, -1e+30
        %v1040 = vsel %vm1024, %v902, -1e+30
        %v1041 = vsel %vm1025, %v905, -1e+30
        %v1042 = vsel %vm1026, %v910, -1e+30
        %v1043 = vsel %vm1027, %v913, -1e+30
        %v1044 = vmax.f32 %v1028, %v1029
        %v1045 = vrot.slane %v1044, 4
        %v1046 = vmax.f32 %v1044, %v1045
        %v1047 = vrot.slane %v1046, 2
        %v1048 = vmax.f32 %v1046, %v1047
        %v1049 = vrot.slane %v1048, 1
        %v1050 = vmax.f32 %v1048, %v1049
        %v1051 = vmax.f32 %v1030, %v1031
        %v1052 = vrot.slane %v1051, 4
        %v1053 = vmax.f32 %v1051, %v1052
        %v1054 = vrot.slane %v1053, 2
        %v1055 = vmax.f32 %v1053, %v1054
        %v1056 = vrot.slane %v1055, 1
        %v1057 = vmax.f32 %v1055, %v1056
        %v1058 = vmax.f32 %v1032, %v1033
        %v1059 = vrot.slane %v1058, 4
        %v1060 = vmax.f32 %v1058, %v1059
        %v1061 = vrot.slane %v1060, 2
        %v1062 = vmax.f32 %v1060, %v1061
        %v1063 = vrot.slane %v1062, 1
        %v1064 = vmax.f32 %v1062, %v1063
        %v1065 = vmax.f32 %v1034, %v1035
        %v1066 = vrot.slane %v1065, 4
        %v1067 = vmax.f32 %v1065, %v1066
        %v1068 = vrot.slane %v1067, 2
        %v1069 = vmax.f32 %v1067, %v1068
        %v1070 = vrot.slane %v1069, 1
        %v1071 = vmax.f32 %v1069, %v1070
        %v1072 = vmax.f32 %v1036, %v1037
        %v1073 = vrot.slane %v1072, 4
        %v1074 = vmax.f32 %v1072, %v1073
        %v1075 = vrot.slane %v1074, 2
        %v1076 = vmax.f32 %v1074, %v1075
        %v1077 = vrot.slane %v1076, 1
        %v1078 = vmax.f32 %v1076, %v1077
        %v1079 = vmax.f32 %v1038, %v1039
        %v1080 = vrot.slane %v1079, 4
        %v1081 = vmax.f32 %v1079, %v1080
        %v1082 = vrot.slane %v1081, 2
        %v1083 = vmax.f32 %v1081, %v1082
        %v1084 = vrot.slane %v1083, 1
        %v1085 = vmax.f32 %v1083, %v1084
        %v1086 = vmax.f32 %v1040, %v1041
        %v1087 = vrot.slane %v1086, 4
        %v1088 = vmax.f32 %v1086, %v1087
        %v1089 = vrot.slane %v1088, 2
        %v1090 = vmax.f32 %v1088, %v1089
        %v1091 = vrot.slane %v1090, 1
        %v1092 = vmax.f32 %v1090, %v1091
        %v1093 = vmax.f32 %v1042, %v1043
        %v1094 = vrot.slane %v1093, 4
        %v1095 = vmax.f32 %v1093, %v1094
        %v1096 = vrot.slane %v1095, 2
        %v1097 = vmax.f32 %v1095, %v1096
        %v1098 = vrot.slane %v1097, 1
        %v1099 = vmax.f32 %v1097, %v1098
        %v1100 = vsub.f32 %v854, %v1050
        %v1101 = vsub.f32 %v857, %v1050
        %v1102 = vsub.f32 %v862, %v1057
        %v1103 = vsub.f32 %v865, %v1057
        %v1104 = vsub.f32 %v870, %v1064
        %v1105 = vsub.f32 %v873, %v1064
        %v1106 = vsub.f32 %v878, %v1071
        %v1107 = vsub.f32 %v881, %v1071
        %v1108 = vsub.f32 %v886, %v1078
        %v1109 = vsub.f32 %v889, %v1078
        %v1110 = vsub.f32 %v894, %v1085
        %v1111 = vsub.f32 %v897, %v1085
        %v1112 = vsub.f32 %v902, %v1092
        %v1113 = vsub.f32 %v905, %v1092
        %v1114 = vsub.f32 %v910, %v1099
        %v1115 = vsub.f32 %v913, %v1099
        %v1116 = vmul.f32 %v1100, 1.442695
        %v1117 = vpow.pop %v1116
        %v1118 = vmul.f32 %v1101, 1.442695
        %v1119 = vpow.pop %v1118
        %v1120 = vmul.f32 %v1102, 1.442695
        %v1121 = vpow.pop %v1120
        %v1122 = vmul.f32 %v1103, 1.442695
        %v1123 = vpow.pop %v1122
        %v1124 = vmul.f32 %v1104, 1.442695
        %v1125 = vpow.pop %v1124
        %v1126 = vmul.f32 %v1105, 1.442695
        %v1127 = vpow.pop %v1126
        %v1128 = vmul.f32 %v1106, 1.442695
        %v1129 = vpow.pop %v1128
        %v1130 = vmul.f32 %v1107, 1.442695
        %v1131 = vpow.pop %v1130
        %v1132 = vmul.f32 %v1108, 1.442695
        %v1133 = vpow.pop %v1132
        %v1134 = vmul.f32 %v1109, 1.442695
        %v1135 = vpow.pop %v1134
        %v1136 = vmul.f32 %v1110, 1.442695
        %v1137 = vpow.pop %v1136
        %v1138 = vmul.f32 %v1111, 1.442695
        %v1139 = vpow.pop %v1138
        %v1140 = vmul.f32 %v1112, 1.442695
        %v1141 = vpow.pop %v1140
        %v1142 = vmul.f32 %v1113, 1.442695
        %v1143 = vpow.pop %v1142
        %v1144 = vmul.f32 %v1114, 1.442695
        %v1145 = vpow.pop %v1144
        %v1146 = vmul.f32 %v1115, 1.442695
        %v1147 = vpow.pop %v1146
        %v1148 = vsel %vm1012, %v1117, 0.0
        %v1149 = vsel %vm1013, %v1119, 0.0
        %v1150 = vsel %vm1014, %v1121, 0.0
        %v1151 = vsel %vm1015, %v1123, 0.0
        %v1152 = vsel %vm1016, %v1125, 0.0
        %v1153 = vsel %vm1017, %v1127, 0.0
        %v1154 = vsel %vm1018, %v1129, 0.0
        %v1155 = vsel %vm1019, %v1131, 0.0
        %v1156 = vsel %vm1020, %v1133, 0.0
        %v1157 = vsel %vm1021, %v1135, 0.0
        %v1158 = vsel %vm1022, %v1137, 0.0
        %v1159 = vsel %vm1023, %v1139, 0.0
        %v1160 = vsel %vm1024, %v1141, 0.0
        %v1161 = vsel %vm1025, %v1143, 0.0
        %v1162 = vsel %vm1026, %v1145, 0.0
        %v1163 = vsel %vm1027, %v1147, 0.0
        %v1164 = vmul.f32 %v1148, %v436
        %v1165 = vmul.f32 %v1149, %v439
        %v1166 = vmul.f32 %v1150, %v436
        %v1167 = vmul.f32 %v1151, %v439
        %v1168 = vmul.f32 %v1152, %v436
        %v1169 = vmul.f32 %v1153, %v439
        %v1170 = vmul.f32 %v1154, %v436
        %v1171 = vmul.f32 %v1155, %v439
        %v1172 = vmul.f32 %v1156, %v436
        %v1173 = vmul.f32 %v1157, %v439
        %v1174 = vmul.f32 %v1158, %v436
        %v1175 = vmul.f32 %v1159, %v439
        %v1176 = vmul.f32 %v1160, %v436
        %v1177 = vmul.f32 %v1161, %v439
        %v1178 = vmul.f32 %v1162, %v436
        %v1179 = vmul.f32 %v1163, %v439
        %v1180 = vadd.f32 %v1164, %v1165
        %v1181 = vrot.slane %v1180, 4
        %v1182 = vadd.f32 %v1180, %v1181
        %v1183 = vrot.slane %v1182, 2
        %v1184 = vadd.f32 %v1182, %v1183
        %v1185 = vrot.slane %v1184, 1
        %v1186 = vadd.f32 %v1184, %v1185
        %v1187 = vadd.f32 %v1166, %v1167
        %v1188 = vrot.slane %v1187, 4
        %v1189 = vadd.f32 %v1187, %v1188
        %v1190 = vrot.slane %v1189, 2
        %v1191 = vadd.f32 %v1189, %v1190
        %v1192 = vrot.slane %v1191, 1
        %v1193 = vadd.f32 %v1191, %v1192
        %v1194 = vadd.f32 %v1168, %v1169
        %v1195 = vrot.slane %v1194, 4
        %v1196 = vadd.f32 %v1194, %v1195
        %v1197 = vrot.slane %v1196, 2
        %v1198 = vadd.f32 %v1196, %v1197
        %v1199 = vrot.slane %v1198, 1
        %v1200 = vadd.f32 %v1198, %v1199
        %v1201 = vadd.f32 %v1170, %v1171
        %v1202 = vrot.slane %v1201, 4
        %v1203 = vadd.f32 %v1201, %v1202
        %v1204 = vrot.slane %v1203, 2
        %v1205 = vadd.f32 %v1203, %v1204
        %v1206 = vrot.slane %v1205, 1
        %v1207 = vadd.f32 %v1205, %v1206
        %v1208 = vadd.f32 %v1172, %v1173
        %v1209 = vrot.slane %v1208, 4
        %v1210 = vadd.f32 %v1208, %v1209
        %v1211 = vrot.slane %v1210, 2
        %v1212 = vadd.f32 %v1210, %v1211
        %v1213 = vrot.slane %v1212, 1
        %v1214 = vadd.f32 %v1212, %v1213
        %v1215 = vadd.f32 %v1174, %v1175
        %v1216 = vrot.slane %v1215, 4
        %v1217 = vadd.f32 %v1215, %v1216
        %v1218 = vrot.slane %v1217, 2
        %v1219 = vadd.f32 %v1217, %v1218
        %v1220 = vrot.slane %v1219, 1
        %v1221 = vadd.f32 %v1219, %v1220
        %v1222 = vadd.f32 %v1176, %v1177
        %v1223 = vrot.slane %v1222, 4
        %v1224 = vadd.f32 %v1222, %v1223
        %v1225 = vrot.slane %v1224, 2
        %v1226 = vadd.f32 %v1224, %v1225
        %v1227 = vrot.slane %v1226, 1
        %v1228 = vadd.f32 %v1226, %v1227
        %v1229 = vadd.f32 %v1178, %v1179
        %v1230 = vrot.slane %v1229, 4
        %v1231 = vadd.f32 %v1229, %v1230
        %v1232 = vrot.slane %v1231, 2
        %v1233 = vadd.f32 %v1231, %v1232
        %v1234 = vrot.slane %v1233, 1
        %v1235 = vadd.f32 %v1233, %v1234
        %v1236 = vadd.f32 %v1148, %v1149
        %v1237 = vrot.slane %v1236, 4
        %v1238 = vadd.f32 %v1236, %v1237
        %v1239 = vrot.slane %v1238, 2
        %v1240 = vadd.f32 %v1238, %v1239
        %v1241 = vrot.slane %v1240, 1
        %v1242 = vadd.f32 %v1240, %v1241
        %v1243 = vadd.f32 %v1150, %v1151
        %v1244 = vrot.slane %v1243, 4
        %v1245 = vadd.f32 %v1243, %v1244
        %v1246 = vrot.slane %v1245, 2
        %v1247 = vadd.f32 %v1245, %v1246
        %v1248 = vrot.slane %v1247, 1
        %v1249 = vadd.f32 %v1247, %v1248
        %v1250 = vadd.f32 %v1152, %v1153
        %v1251 = vrot.slane %v1250, 4
        %v1252 = vadd.f32 %v1250, %v1251
        %v1253 = vrot.slane %v1252, 2
        %v1254 = vadd.f32 %v1252, %v1253
        %v1255 = vrot.slane %v1254, 1
        %v1256 = vadd.f32 %v1254, %v1255
        %v1257 = vadd.f32 %v1154, %v1155
        %v1258 = vrot.slane %v1257, 4
        %v1259 = vadd.f32 %v1257, %v1258
        %v1260 = vrot.slane %v1259, 2
        %v1261 = vadd.f32 %v1259, %v1260
        %v1262 = vrot.slane %v1261, 1
        %v1263 = vadd.f32 %v1261, %v1262
        %v1264 = vadd.f32 %v1156, %v1157
        %v1265 = vrot.slane %v1264, 4
        %v1266 = vadd.f32 %v1264, %v1265
        %v1267 = vrot.slane %v1266, 2
        %v1268 = vadd.f32 %v1266, %v1267
        %v1269 = vrot.slane %v1268, 1
        %v1270 = vadd.f32 %v1268, %v1269
        %v1271 = vadd.f32 %v1158, %v1159
        %v1272 = vrot.slane %v1271, 4
        %v1273 = vadd.f32 %v1271, %v1272
        %v1274 = vrot.slane %v1273, 2
        %v1275 = vadd.f32 %v1273, %v1274
        %v1276 = vrot.slane %v1275, 1
        %v1277 = vadd.f32 %v1275, %v1276
        %v1278 = vadd.f32 %v1160, %v1161
        %v1279 = vrot.slane %v1278, 4
        %v1280 = vadd.f32 %v1278, %v1279
        %v1281 = vrot.slane %v1280, 2
        %v1282 = vadd.f32 %v1280, %v1281
        %v1283 = vrot.slane %v1282, 1
        %v1284 = vadd.f32 %v1282, %v1283
        %v1285 = vadd.f32 %v1162, %v1163
        %v1286 = vrot.slane %v1285, 4
        %v1287 = vadd.f32 %v1285, %v1286
        %v1288 = vrot.slane %v1287, 2
        %v1289 = vadd.f32 %v1287, %v1288
        %v1290 = vrot.slane %v1289, 1
        %v1291 = vadd.f32 %v1289, %v1290
        %v1292 = vmax.f32 %v1242, 1e-20
        %v1293 = vmax.f32 %v1249, 1e-20
        %v1294 = vmax.f32 %v1256, 1e-20
        %v1295 = vmax.f32 %v1263, 1e-20
        %v1296 = vmax.f32 %v1270, 1e-20
        %v1297 = vmax.f32 %v1277, 1e-20
        %v1298 = vmax.f32 %v1284, 1e-20
        %v1299 = vmax.f32 %v1291, 1e-20
        %v1300 = vrcp.pop %v1292
        %v1301 = vrcp.pop %v1293
        %v1302 = vrcp.pop %v1294
        %v1303 = vrcp.pop %v1295
        %v1304 = vrcp.pop %v1296
        %v1305 = vrcp.pop %v1297
        %v1306 = vrcp.pop %v1298
        %v1307 = vrcp.pop %v1299
        %v1308 = vmul.f32 %v1186, %v1300
        %v1309 = vmul.f32 %v1193, %v1301
        %v1310 = vmul.f32 %v1200, %v1302
        %v1311 = vmul.f32 %v1207, %v1303
        %v1312 = vmul.f32 %v1214, %v1304
        %v1313 = vmul.f32 %v1221, %v1305
        %v1314 = vmul.f32 %v1228, %v1306
        %v1315 = vmul.f32 %v1235, %v1307
        %v1317 = vrot.slane %v589, 1
        %v1318 = vrot.slane %v589, 2
        %v1319 = vrot.slane %v589, 3
        %v1320 = vrot.slane %v589, 4
        %v1321 = vrot.slane %v589, 5
        %v1322 = vrot.slane %v589, 6
        %v1323 = vrot.slane %v589, 7
        %v1332 = vadd.f32 %v1308, %v589
        %v1333 = vadd.f32 %v1309, %v1317
        %v1334 = vadd.f32 %v1310, %v1318
        %v1335 = vadd.f32 %v1311, %v1319
        %v1336 = vadd.f32 %v1312, %v1320
        %v1337 = vadd.f32 %v1313, %v1321
        %v1338 = vadd.f32 %v1314, %v1322
        %v1339 = vadd.f32 %v1315, %v1323
        %v1348 = vrot.slane %v1333, 7
        %vm1349 = vcmask 1041409
        %v1350 = vsel %vm1349, %v1348, %v1332
        %v1351 = vrot.slane %v1334, 6
        %vm1352 = vcmask 1042434
        %v1353 = vsel %vm1352, %v1351, %v1350
        %v1354 = vrot.slane %v1335, 5
        %vm1355 = vcmask 1043459
        %v1356 = vsel %vm1355, %v1354, %v1353
        %v1357 = vrot.slane %v1336, 4
        %vm1358 = vcmask 1044484
        %v1359 = vsel %vm1358, %v1357, %v1356
        %v1360 = vrot.slane %v1337, 3
        %vm1361 = vcmask 1045509
        %v1362 = vsel %vm1361, %v1360, %v1359
        %v1363 = vrot.slane %v1338, 2
        %vm1364 = vcmask 1046534
        %v1365 = vsel %vm1364, %v1363, %v1362
        %v1366 = vrot.slane %v1339, 1
        %vm1367 = vcmask 1047559
        %v1368 = vsel %vm1367, %v1366, %v1365
        %1370 = vst [vmem:[%s314] sm:$0xff] %v1368
        %s1371 = sand.u32 %s208, 1
        %s1372 = scalar_lea.sflag [#allocation3], %s1371
        %s1373 = sand.u32 %s208, 1
        %s1374 = smul.addr %s1373, 8
        %s1375 = scalar_lea.vmem [#allocation2], %s1374
        // Predicated region
        $region53: #{unit_gat4_forward.3} parent=51 // pred_check
          %p1376 = pneg %p218
        $region54: #{unit_gat4_forward.3} parent=51 // pred_check_branch
          %1378 = sbr.rel (%p1376) target = $region56
        $region55: #{unit_gat4_forward.3} parent=51 // pred_region
          %s1380 = ssub.s32 128, 128
          %1381 = vsyncadd %s1372, %s1380
          %s1382 = smul.addr %s22, 128
          %s1383 = scalar_lea.hbm %s8, %s1382
          %s1385 = sshll.u32 %s1375, 4
          %s1386 = int_to_ptr.vmem [resolvable:$true] %s1385
          %1388 = dma.vmem_to_hbm [thread:$0]  %s1386, 128, %s1383, %s1372
        $region56: #{unit_gat4_forward.3} parent=51 // pred_fallthru
          _
      $region52: #{unit_gat4_forward.3} parent=5 // pred_fallthru
        _
      %p1389 = scmp.le.s32.totalorder 2, %s17
      // Predicated region
      $region57: #{unit_gat4_forward.3} parent=5 // pred_check
        %p1390 = pneg %p1389
      $region58: #{unit_gat4_forward.3} parent=5 // pred_check_branch
        %1392 = sbr.rel (%p1390) target = $region60
      $region59: #{unit_gat4_forward.3} parent=5 // pred_region
        %s1393 = ssub.s32 %s17, 2
        // Predicated region
        $region61: #{unit_gat4_forward.3} parent=59 // pred_check
          %p1394 = pneg %p224
        $region62: #{unit_gat4_forward.3} parent=59 // pred_check_branch
          %1396 = sbr.rel (%p1394) target = $region64
        $region63: #{unit_gat4_forward.3} parent=59 // pred_region
          %s1397 = sand.u32 %s209, 1
          %s1398 = scalar_lea.sflag [#allocation3], %s1397
          %s1399 = sand.u32 %s209, 1
          %s1400 = smul.addr %s1399, 8
          %s1401 = scalar_lea.vmem [#allocation2], %s1400
          %1402 = dma.done %s1398, 128
        $region64: #{unit_gat4_forward.3} parent=59 // pred_fallthru
          _
      $region60: #{unit_gat4_forward.3} parent=5 // pred_fallthru
        _
    $region6: #{unit_gat4_forward.3} parent=1 // loop_footer
      %s21 = sadd.s32 1, %s17
    $region7: #{unit_gat4_forward.3} parent=1 // loop_footer_branch
      %16 = sbr.rel target = $region3
    $region8: #{unit_gat4_forward.3} parent=1 // loop_exit
      _
    %1403 = vsyncpa [#allocation3], 1
    %s1404 = scalar_lea.sflag [#allocation3], 1
    %1405 = vsyncpa %s1404, 1

</llo_original>
